<compile_context>
chip_gen: v7x
topology: tpu7x:2x2x1
jax: 0.10.0
libtpu: 0.0.40
codegen_flags: <defaults>
</compile_context>

<pallas_src>
import functools
import math

import jax
import jax.numpy as jnp
from jax.experimental import pallas as pl
from jax.experimental.pallas import tpu as pltpu


def _round_up(x, m):
    return ((x + m - 1) // m) * m


def _cdiv(a, b):
    return (a + b - 1) // b


# bf16 sublane packing -> pad the contraction (K) axis to a multiple of 16.
K_ALIGN = 16

# Adaptive M-tile sizing (lane axis).
MT_MAX = 16384                        # cap: keeps each patch DMA ~1-10 MiB
PIPELINE_VMEM_BUDGET = 10 << 20       # budget for the double-buffered tiles
MIN_GRID_STEPS = 4                    # v7x megacore needs >=2 grid steps; >=4
                                      # also amortizes per-step overhead
VMEM_LIMIT_BYTES = 32 * 1024 * 1024   # explicit: v5e scoped default is 16 MiB;
                                      # well under v7x's 64 MiB per-TC VMEM


# ---------------------------------------------------------------------------
# Pallas kernel: one fused complex-GEMM tile:  out = act(W @ P + b)
#   W : (R, K)  bf16 packed complex (and polyphase, for transpose convs) weights
#   b : (R, 1)  f32 packed complex bias
#   P : (K, Mt) bf16 im2col patches, output positions on lanes
#   o : (R, Mt) [real rows | imag rows] (x4 phases for up layers), lane-dense
# ---------------------------------------------------------------------------
def _cgemm_kernel(w_ref, b_ref, p_ref, o_ref, *, relu):
    acc = jnp.dot(w_ref[...], p_ref[...], preferred_element_type=jnp.float32)
    acc = acc + b_ref[...]            # (R, 1) f32 broadcast along lanes
    if relu:
        acc = jnp.maximum(acc, 0.0)   # complex ReLU == ReLU on both planes
    o_ref[...] = acc.astype(o_ref.dtype)


def _choose_mt(K, R, M, out_bytes):
    """Lane-tile size: big enough to amortize per-step overhead and keep DMAs
    large, small enough for VMEM (v7x: 64 MiB/TC) and >= MIN_GRID_STEPS steps."""
    bytes_per_col = 2 * (K * 2 + R * out_bytes)          # x2: double buffering
    mt = (PIPELINE_VMEM_BUDGET // bytes_per_col) // 128 * 128
    mt = max(128, min(mt, MT_MAX))
    m_blocks = _cdiv(M, 128)
    if m_blocks >= MIN_GRID_STEPS:
        mt = min(mt, max(128, (m_blocks // MIN_GRID_STEPS) * 128))
    else:
        mt = min(mt, m_blocks * 128)
    return mt


def fused_complex_gemm(wp, bp, patches, relu, out_dtype=jnp.bfloat16):
    """wp: [R, K] bf16; bp: [R, 1] f32; patches: [K, M] bf16 -> [R, M]."""
    R, K = wp.shape
    Kp, M = patches.shape
    assert Kp == K, (Kp, K)

    out_bytes = jnp.dtype(out_dtype).itemsize
    Mt = _choose_mt(K, R, M, out_bytes)
    grid = (_cdiv(M, Mt),)            # ragged last tile handled by Pallas masks

    out = pl.pallas_call(
        functools.partial(_cgemm_kernel, relu=relu),
        out_shape=jax.ShapeDtypeStruct((R, M), out_dtype),
        grid=grid,
        in_specs=[
            pl.BlockSpec((R, K), lambda i: (0, 0)),    # weights: VMEM-resident
            pl.BlockSpec((R, 1), lambda i: (0, 0)),    # bias:    VMEM-resident
            pl.BlockSpec((K, Mt), lambda i: (0, i)),   # patch tile (pipelined)
        ],
        out_specs=pl.BlockSpec((R, Mt), lambda i: (0, i)),
        compiler_params=pltpu.CompilerParams(
            dimension_semantics=("parallel",),         # v7x: 2 TCs share tiles
            vmem_limit_bytes=VMEM_LIMIT_BYTES,
        ),
    )(wp, bp, patches)
    return out


# ---------------------------------------------------------------------------
# im2col glue (plain JAX, static slices -> fused by XLA with neighbouring
# elementwise ops):  (C2, N, H, W) -> patches (k*k*C2 padded to %16, N*Ho*Wo)
# Row order: tap-major ((ki, kj)), channel-minor.
# TODO(synk): fold this gather into the Pallas kernel (halo row-band DMA) to
#   remove the patch write+read HBM round trip entirely.
# ---------------------------------------------------------------------------
def im2col_planar(x, k, stride, pad):
    C2, N, H, W = x.shape
    xp = jnp.pad(x, ((0, 0), (0, 0), (pad, pad), (pad, pad)))
    Ho = (H + 2 * pad - k) // stride + 1
    Wo = (W + 2 * pad - k) // stride + 1
    taps = []
    for ki in range(k):
        for kj in range(k):
            taps.append(xp[:, :, ki:ki + stride * (Ho - 1) + 1:stride,
                              kj:kj + stride * (Wo - 1) + 1:stride])
    p = jnp.stack(taps, axis=0)                       # (k*k, C2, N, Ho, Wo)
    p = p.reshape(k * k * C2, N * Ho * Wo)
    K = k * k * C2
    Kpad = _round_up(K, K_ALIGN)
    if Kpad != K:
        p = jnp.pad(p, ((0, Kpad - K), (0, 0)))
    return p, (N, Ho, Wo)


# ---------------------------------------------------------------------------
# Layers (planar layout, bf16 activations)
# ---------------------------------------------------------------------------
def down_layer(x, lw, lb, relu, out_dtype=jnp.bfloat16):
    """ComplexConv2d 3x3, stride 2, pad 1 (+ complex ReLU).
       x: (2*Cin, N, H, W) -> (2*Cout, N, H//2, W//2)."""
    patches, (N, Ho, Wo) = im2col_planar(x, 3, 2, 1)
    out = fused_complex_gemm(lw, lb, patches, relu=relu, out_dtype=out_dtype)
    return out.reshape(lw.shape[0], N, Ho, Wo)


def up_layer(x, lw, lb, relu, out_dtype=jnp.bfloat16):
    """ComplexConvTranspose2d 4x4, stride 2, pad 1 (+ optional complex ReLU),
       lowered polyphase: one 3x3 stride-1 im2col + single matmul emitting all
       4 output phases, then a depth-to-space interleave in glue.
       x: (2*Cin, N, H, W) -> (2*Cout, N, 2H, 2W).
       TODO(synk): 2x2 polyphase taps (drop the 5 structurally-zero taps) and
         in-kernel depth-to-space would cut up-layer HBM traffic ~2x more."""
    C2in, N, H, W = x.shape
    patches, _ = im2col_planar(x, 3, 1, 1)
    out = fused_complex_gemm(lw, lb, patches, relu=relu, out_dtype=out_dtype)
    C2out = lw.shape[0] // 4
    out = out.reshape(2, 2, C2out, N, H, W)                # (rh, rw, c2, N, H, W)
    out = out.transpose(2, 3, 4, 0, 5, 1)                  # (c2, N, H, rh, W, rw)
    return out.reshape(C2out, N, 2 * H, 2 * W)


# ---------------------------------------------------------------------------
# One-time parameter packing (hoisted out of the forward path)
# ---------------------------------------------------------------------------
def _pack_complex_blocks(wr_e, wi_e):
    """wr_e, wi_e: (Cout, Cin, kh, kw) effective forward-conv weights.
       Returns (2*Cout, 2*Cin, kh, kw): [[wr, -wi], [wi, wr]]."""
    top = jnp.concatenate([wr_e, -wi_e], axis=1)
    bot = jnp.concatenate([wi_e, wr_e], axis=1)
    return jnp.concatenate([top, bot], axis=0)


def pack_down_params(p):
    wr, wi, br, bi = p                          # wr, wi: (Cout, Cin, 3, 3)
    Cout, Cin, k, _ = wr.shape
    Wc = _pack_complex_blocks(wr, wi)           # (2Cout, 2Cin, 3, 3)
    A = Wc.transpose(0, 2, 3, 1).reshape(2 * Cout, k * k * 2 * Cin)
    Kpad = _round_up(A.shape[1], K_ALIGN)
    A = jnp.pad(A, ((0, 0), (0, Kpad - A.shape[1])))
    bcol = jnp.concatenate([br - bi, br + bi]).reshape(2 * Cout, 1)
    return A.astype(jnp.bfloat16), bcol.astype(jnp.float32)


def pack_up_params(p):
    """ConvTranspose2d(4, stride=2, pad=1) -> polyphase weights for a 3x3
       stride-1 conv producing 4 interleaved output phases per input pixel.
       For window offset (a, b) and output phase (rh, rw):
         kh = rh + 3 - 2a, kw = rw + 3 - 2b  (tap valid iff 0 <= kh, kw < 4)."""
    wr, wi, br, bi = p                          # wr, wi: (Cin, Cout, 4, 4)
    Cin, Cout, k, _ = wr.shape
    assert k == 4
    Wc = _pack_complex_blocks(wr.transpose(1, 0, 2, 3),
                              wi.transpose(1, 0, 2, 3))    # (2Cout, 2Cin, 4, 4)
    zero = jnp.zeros_like(Wc[:, :, 0, 0])
    phase_blocks = []
    for rh in range(2):
        for rw in range(2):
            taps = []
            for a in range(3):
                for b_ in range(3):
                    kh = rh + 3 - 2 * a
                    kw = rw + 3 - 2 * b_
                    if 0 <= kh < 4 and 0 <= kw < 4:
                        taps.append(Wc[:, :, kh, kw])
                    else:
                        taps.append(zero)
            blk = jnp.stack(taps, axis=0)                  # (9, 2Cout, 2Cin)
            blk = blk.transpose(1, 0, 2).reshape(2 * Cout, 9 * 2 * Cin)
            phase_blocks.append(blk)
    A = jnp.concatenate(phase_blocks, axis=0)              # (4*2Cout, 9*2Cin)
    Kpad = _round_up(A.shape[1], K_ALIGN)
    A = jnp.pad(A, ((0, 0), (0, Kpad - A.shape[1])))
    bvec = jnp.concatenate([br - bi, br + bi])             # (2Cout,)
    bcol = jnp.tile(bvec, 4).reshape(4 * 2 * Cout, 1)
    return A.astype(jnp.bfloat16), bcol.astype(jnp.float32)


def pack_params(params):
    return {
        "down1": pack_down_params(params["down1"]),
        "down2": pack_down_params(params["down2"]),
        "down3": pack_down_params(params["down3"]),
        "up3": pack_up_params(params["up3"]),
        "up2": pack_up_params(params["up2"]),
        "up1": pack_up_params(params["up1"]),
    }


# ---------------------------------------------------------------------------
# net6 forward (planar bf16 layout internally; final layer + atan2 in f32)
# ---------------------------------------------------------------------------
def net6_forward(x_real, x_imag, packed):
    # NCHW complex input (Cin=1) -> planar (2, N, H, W): row0 = real, row1 = imag
    x = jnp.stack([x_real[:, 0], x_imag[:, 0]], axis=0).astype(jnp.bfloat16)

    d1 = down_layer(x, *packed["down1"], relu=True)
    d2 = down_layer(d1, *packed["down2"], relu=True)
    d3 = down_layer(d2, *packed["down3"], relu=True)
    u3 = up_layer(d3, *packed["up3"], relu=True)
    # Skip-adds stay in glue: XLA fuses them into the next layer's im2col gather.
    u2 = up_layer(u3 + d2, *packed["up2"], relu=True)
    # Final layer emits f32 so the atan2 phase is computed at full precision.
    u1 = up_layer(u2 + d1, *packed["up1"], relu=False,
                  out_dtype=jnp.float32)                    # (2, N, H0, W0)

    out_r = u1[0]
    out_i = u1[1]
    # TODO(synk): atan2 epilogue kept in XLA glue (fuses with the final
    # depth-to-space); Mosaic atan2 lowering is not guaranteed in-kernel.
    holophase = jnp.arctan2(out_r, out_i)
    return jnp.squeeze(holophase)      # matches torch.squeeze semantics


# ---------------------------------------------------------------------------
# Deterministic parameter init (PyTorch-default-style uniform bounds)
# ---------------------------------------------------------------------------
def _conv_params(key, cin, cout, k):
    k1, k2, k3, k4 = jax.random.split(key, 4)
    bound = 1.0 / math.sqrt(cin * k * k)
    wr = jax.random.uniform(k1, (cout, cin, k, k), jnp.float32, -bound, bound)
    wi = jax.random.uniform(k2, (cout, cin, k, k), jnp.float32, -bound, bound)
    br = jax.random.uniform(k3, (cout,), jnp.float32, -bound, bound)
    bi = jax.random.uniform(k4, (cout,), jnp.float32, -bound, bound)
    return (wr, wi, br, bi)


def _convT_params(key, cin, cout, k):
    k1, k2, k3, k4 = jax.random.split(key, 4)
    bound = 1.0 / math.sqrt(cout * k * k)
    wr = jax.random.uniform(k1, (cin, cout, k, k), jnp.float32, -bound, bound)
    wi = jax.random.uniform(k2, (cin, cout, k, k), jnp.float32, -bound, bound)
    br = jax.random.uniform(k3, (cout,), jnp.float32, -bound, bound)
    bi = jax.random.uniform(k4, (cout,), jnp.float32, -bound, bound)
    return (wr, wi, br, bi)


def init_params(key):
    ks = jax.random.split(key, 6)
    return {
        "down1": _conv_params(ks[0], 1, 4, 3),
        "down2": _conv_params(ks[1], 4, 8, 3),
        "down3": _conv_params(ks[2], 8, 16, 3),
        "up3": _convT_params(ks[3], 16, 8, 4),
        "up2": _convT_params(ks[4], 8, 4, 4),
        "up1": _convT_params(ks[5], 4, 1, 4),
    }


if __name__ == "__main__":
    key = jax.random.PRNGKey(0)
    kx1, kx2, kp = jax.random.split(key, 3)

    N, H, W = 2, 16, 16
    # Complex input, NCHW like PyTorch, split into real/imag float32 planes.
    x_real = jax.random.normal(kx1, (N, 1, H, W), jnp.float32)
    x_imag = jax.random.normal(kx2, (N, 1, H, W), jnp.float32)

    params = init_params(kp)
    packed = pack_params(params)     # one-time weight/bias packing (hoisted)

    holophase = jax.jit(net6_forward)(x_real, x_imag, packed)
    jax.block_until_ready(holophase)
    assert holophase.shape == (N, H, W), holophase.shape
    assert bool(jnp.all(jnp.isfinite(holophase)))
    print("KERNEL_OK")
</pallas_src>

<mosaic_0001>
module attributes {stable_mosaic.version = 11 : i64} {
  func.func @_cgemm_kernel(%arg0: i32, %arg1: memref<8x32xbf16, #tpu.memory_space<vmem>>, %arg2: memref<8x1xf32, #tpu.memory_space<vmem>>, %arg3: memref<32x128xbf16, #tpu.memory_space<vmem>>, %arg4: memref<8x128xbf16, #tpu.memory_space<vmem>>) attributes {dimension_semantics = [#tpu.dimension_semantics<parallel>], iteration_bounds = array<i64: 1>, scalar_prefetch = 0 : i64, scratch_operands = 0 : i64, tpu.core_type = #tpu.core_type<tc>, window_params = [{pipeline_mode = #tpu.pipeline_mode<synchronous>, transform_indices = @transform_0, window_bounds = array<i64: 8, 32>}, {pipeline_mode = #tpu.pipeline_mode<synchronous>, transform_indices = @transform_1, window_bounds = array<i64: 8, 1>}, {transform_indices = @transform_2, window_bounds = array<i64: 32, 128>}, {transform_indices = @transform_3, window_bounds = array<i64: 8, 128>}]} {
    %c0 = arith.constant 0 : index
    %c0_0 = arith.constant 0 : index
    %0 = vector.load %arg1[%c0, %c0_0] : memref<8x32xbf16, #tpu.memory_space<vmem>>, vector<8x32xbf16>
    %c0_1 = arith.constant 0 : index
    %c0_2 = arith.constant 0 : index
    %1 = vector.load %arg3[%c0_1, %c0_2] : memref<32x128xbf16, #tpu.memory_space<vmem>>, vector<32x128xbf16>
    %cst = arith.constant dense<0.000000e+00> : vector<8x128xf32>
    %2 = tpu.matmul %0, %1, %cst {dimension_numbers = #tpu.dot_dimension_numbers<[1], [0], [0], [1], [0, 0, 1, 1], [], []>} : vector<8x32xbf16>, vector<32x128xbf16>, vector<8x128xf32> -> vector<8x128xf32>
    %c0_3 = arith.constant 0 : index
    %c0_4 = arith.constant 0 : index
    %3 = vector.load %arg2[%c0_3, %c0_4] : memref<8x1xf32, #tpu.memory_space<vmem>>, vector<8x1xf32>
    %4 = vector.broadcast %3 : vector<8x1xf32> to vector<8x128xf32>
    %5 = arith.addf %2, %4 : vector<8x128xf32>
    %cst_5 = arith.constant 0.000000e+00 : f32
    %6 = vector.broadcast %cst_5 : f32 to vector<8x128xf32>
    %7 = arith.maximumf %5, %6 : vector<8x128xf32>
    %8 = arith.truncf %7 : vector<8x128xf32> to vector<8x128xbf16>
    %c0_6 = arith.constant 0 : index
    %c0_7 = arith.constant 0 : index
    %9 = vector.load %arg4[%c0_6, %c0_7] : memref<8x128xbf16, #tpu.memory_space<vmem>>, vector<8x128xbf16>
    tpu.vector_store %arg4[%c0_6, %c0_7], %8 {strides = array<i32>} : memref<8x128xbf16, #tpu.memory_space<vmem>>, vector<8x128xbf16>,
    return
  }
  func.func @transform_0(%arg0: i32) -> (i32, i32) {
    %c0_i32 = arith.constant 0 : i32
    %c0_i32_0 = arith.constant 0 : i32
    %c0_i32_1 = arith.constant 0 : i32
    return %c0_i32, %c0_i32_0 : i32, i32
  }
  func.func @transform_1(%arg0: i32) -> (i32, i32) {
    %c0_i32 = arith.constant 0 : i32
    %c0_i32_0 = arith.constant 0 : i32
    %c0_i32_1 = arith.constant 0 : i32
    return %c0_i32, %c0_i32_0 : i32, i32
  }
  func.func @transform_2(%arg0: i32) -> (i32, i32) {
    %c0_i32 = arith.constant 0 : i32
    %c0_i32_0 = arith.constant 0 : i32
    return %c0_i32, %arg0 : i32, i32
  }
  func.func @transform_3(%arg0: i32) -> (i32, i32) {
    %c0_i32 = arith.constant 0 : i32
    %c0_i32_0 = arith.constant 0 : i32
    return %c0_i32, %arg0 : i32, i32
  }
}

module attributes {stable_mosaic.version = 11 : i64} {
  func.func @_cgemm_kernel(%arg0: i32, %arg1: memref<16x80xbf16, #tpu.memory_space<vmem>>, %arg2: memref<16x1xf32, #tpu.memory_space<vmem>>, %arg3: memref<80x128xbf16, #tpu.memory_space<vmem>>, %arg4: memref<16x128xbf16, #tpu.memory_space<vmem>>) attributes {dimension_semantics = [#tpu.dimension_semantics<parallel>], iteration_bounds = array<i64: 1>, scalar_prefetch = 0 : i64, scratch_operands = 0 : i64, tpu.core_type = #tpu.core_type<tc>, window_params = [{pipeline_mode = #tpu.pipeline_mode<synchronous>, transform_indices = @transform_0, window_bounds = array<i64: 16, 80>}, {pipeline_mode = #tpu.pipeline_mode<synchronous>, transform_indices = @transform_1, window_bounds = array<i64: 16, 1>}, {transform_indices = @transform_2, window_bounds = array<i64: 80, 128>}, {transform_indices = @transform_3, window_bounds = array<i64: 16, 128>}]} {
    %c0 = arith.constant 0 : index
    %c0_0 = arith.constant 0 : index
    %0 = vector.load %arg1[%c0, %c0_0] : memref<16x80xbf16, #tpu.memory_space<vmem>>, vector<16x80xbf16>
    %c0_1 = arith.constant 0 : index
    %c0_2 = arith.constant 0 : index
    %1 = vector.load %arg3[%c0_1, %c0_2] : memref<80x128xbf16, #tpu.memory_space<vmem>>, vector<80x128xbf16>
    %cst = arith.constant dense<0.000000e+00> : vector<16x128xf32>
    %2 = tpu.matmul %0, %1, %cst {dimension_numbers = #tpu.dot_dimension_numbers<[1], [0], [0], [1], [0, 0, 1, 1], [], []>} : vector<16x80xbf16>, vector<80x128xbf16>, vector<16x128xf32> -> vector<16x128xf32>
    %c0_3 = arith.constant 0 : index
    %c0_4 = arith.constant 0 : index
    %3 = vector.load %arg2[%c0_3, %c0_4] : memref<16x1xf32, #tpu.memory_space<vmem>>, vector<16x1xf32>
    %4 = vector.broadcast %3 : vector<16x1xf32> to vector<16x128xf32>
    %5 = arith.addf %2, %4 : vector<16x128xf32>
    %cst_5 = arith.constant 0.000000e+00 : f32
    %6 = vector.broadcast %cst_5 : f32 to vector<16x128xf32>
    %7 = arith.maximumf %5, %6 : vector<16x128xf32>
    %8 = arith.truncf %7 : vector<16x128xf32> to vector<16x128xbf16>
    %c0_6 = arith.constant 0 : index
    %c0_7 = arith.constant 0 : index
    %9 = vector.load %arg4[%c0_6, %c0_7] : memref<16x128xbf16, #tpu.memory_space<vmem>>, vector<16x128xbf16>
    tpu.vector_store %arg4[%c0_6, %c0_7], %8 {strides = array<i32>} : memref<16x128xbf16, #tpu.memory_space<vmem>>, vector<16x128xbf16>,
    return
  }
  func.func @transform_0(%arg0: i32) -> (i32, i32) {
    %c0_i32 = arith.constant 0 : i32
    %c0_i32_0 = arith.constant 0 : i32
    %c0_i32_1 = arith.constant 0 : i32
    return %c0_i32, %c0_i32_0 : i32, i32
  }
  func.func @transform_1(%arg0: i32) -> (i32, i32) {
    %c0_i32 = arith.constant 0 : i32
    %c0_i32_0 = arith.constant 0 : i32
    %c0_i32_1 = arith.constant 0 : i32
    return %c0_i32, %c0_i32_0 : i32, i32
  }
  func.func @transform_2(%arg0: i32) -> (i32, i32) {
    %c0_i32 = arith.constant 0 : i32
    %c0_i32_0 = arith.constant 0 : i32
    return %c0_i32, %arg0 : i32, i32
  }
  func.func @transform_3(%arg0: i32) -> (i32, i32) {
    %c0_i32 = arith.constant 0 : i32
    %c0_i32_0 = arith.constant 0 : i32
    return %c0_i32, %arg0 : i32, i32
  }
}

module attributes {stable_mosaic.version = 11 : i64} {
  func.func @_cgemm_kernel(%arg0: i32, %arg1: memref<32x144xbf16, #tpu.memory_space<vmem>>, %arg2: memref<32x1xf32, #tpu.memory_space<vmem>>, %arg3: memref<144x128xbf16, #tpu.memory_space<vmem>>, %arg4: memref<32x128xbf16, #tpu.memory_space<vmem>>) attributes {dimension_semantics = [#tpu.dimension_semantics<parallel>], iteration_bounds = array<i64: 1>, scalar_prefetch = 0 : i64, scratch_operands = 0 : i64, tpu.core_type = #tpu.core_type<tc>, window_params = [{pipeline_mode = #tpu.pipeline_mode<synchronous>, transform_indices = @transform_0, window_bounds = array<i64: 32, 144>}, {pipeline_mode = #tpu.pipeline_mode<synchronous>, transform_indices = @transform_1, window_bounds = array<i64: 32, 1>}, {transform_indices = @transform_2, window_bounds = array<i64: 144, 128>}, {transform_indices = @transform_3, window_bounds = array<i64: 32, 128>}]} {
    %c0 = arith.constant 0 : index
    %c0_0 = arith.constant 0 : index
    %0 = vector.load %arg1[%c0, %c0_0] : memref<32x144xbf16, #tpu.memory_space<vmem>>, vector<32x144xbf16>
    %c0_1 = arith.constant 0 : index
    %c0_2 = arith.constant 0 : index
    %1 = vector.load %arg3[%c0_1, %c0_2] : memref<144x128xbf16, #tpu.memory_space<vmem>>, vector<144x128xbf16>
    %cst = arith.constant dense<0.000000e+00> : vector<32x128xf32>
    %2 = tpu.matmul %0, %1, %cst {dimension_numbers = #tpu.dot_dimension_numbers<[1], [0], [0], [1], [0, 0, 1, 1], [], []>} : vector<32x144xbf16>, vector<144x128xbf16>, vector<32x128xf32> -> vector<32x128xf32>
    %c0_3 = arith.constant 0 : index
    %c0_4 = arith.constant 0 : index
    %3 = vector.load %arg2[%c0_3, %c0_4] : memref<32x1xf32, #tpu.memory_space<vmem>>, vector<32x1xf32>
    %4 = vector.broadcast %3 : vector<32x1xf32> to vector<32x128xf32>
    %5 = arith.addf %2, %4 : vector<32x128xf32>
    %cst_5 = arith.constant 0.000000e+00 : f32
    %6 = vector.broadcast %cst_5 : f32 to vector<32x128xf32>
    %7 = arith.maximumf %5, %6 : vector<32x128xf32>
    %8 = arith.truncf %7 : vector<32x128xf32> to vector<32x128xbf16>
    %c0_6 = arith.constant 0 : index
    %c0_7 = arith.constant 0 : index
    %9 = vector.load %arg4[%c0_6, %c0_7] : memref<32x128xbf16, #tpu.memory_space<vmem>>, vector<32x128xbf16>
    tpu.vector_store %arg4[%c0_6, %c0_7], %8 {strides = array<i32>} : memref<32x128xbf16, #tpu.memory_space<vmem>>, vector<32x128xbf16>,
    return
  }
  func.func @transform_0(%arg0: i32) -> (i32, i32) {
    %c0_i32 = arith.constant 0 : i32
    %c0_i32_0 = arith.constant 0 : i32
    %c0_i32_1 = arith.constant 0 : i32
    return %c0_i32, %c0_i32_0 : i32, i32
  }
  func.func @transform_1(%arg0: i32) -> (i32, i32) {
    %c0_i32 = arith.constant 0 : i32
    %c0_i32_0 = arith.constant 0 : i32
    %c0_i32_1 = arith.constant 0 : i32
    return %c0_i32, %c0_i32_0 : i32, i32
  }
  func.func @transform_2(%arg0: i32) -> (i32, i32) {
    %c0_i32 = arith.constant 0 : i32
    %c0_i32_0 = arith.constant 0 : i32
    return %c0_i32, %arg0 : i32, i32
  }
  func.func @transform_3(%arg0: i32) -> (i32, i32) {
    %c0_i32 = arith.constant 0 : i32
    %c0_i32_0 = arith.constant 0 : i32
    return %c0_i32, %arg0 : i32, i32
  }
}

module attributes {stable_mosaic.version = 11 : i64} {
  func.func @_cgemm_kernel(%arg0: i32, %arg1: memref<64x288xbf16, #tpu.memory_space<vmem>>, %arg2: memref<64x1xf32, #tpu.memory_space<vmem>>, %arg3: memref<288x128xbf16, #tpu.memory_space<vmem>>, %arg4: memref<64x128xbf16, #tpu.memory_space<vmem>>) attributes {dimension_semantics = [#tpu.dimension_semantics<parallel>], iteration_bounds = array<i64: 1>, scalar_prefetch = 0 : i64, scratch_operands = 0 : i64, tpu.core_type = #tpu.core_type<tc>, window_params = [{pipeline_mode = #tpu.pipeline_mode<synchronous>, transform_indices = @transform_0, window_bounds = array<i64: 64, 288>}, {pipeline_mode = #tpu.pipeline_mode<synchronous>, transform_indices = @transform_1, window_bounds = array<i64: 64, 1>}, {transform_indices = @transform_2, window_bounds = array<i64: 288, 128>}, {transform_indices = @transform_3, window_bounds = array<i64: 64, 128>}]} {
    %c0 = arith.constant 0 : index
    %c0_0 = arith.constant 0 : index
    %0 = vector.load %arg1[%c0, %c0_0] : memref<64x288xbf16, #tpu.memory_space<vmem>>, vector<64x288xbf16>
    %c0_1 = arith.constant 0 : index
    %c0_2 = arith.constant 0 : index
    %1 = vector.load %arg3[%c0_1, %c0_2] : memref<288x128xbf16, #tpu.memory_space<vmem>>, vector<288x128xbf16>
    %cst = arith.constant dense<0.000000e+00> : vector<64x128xf32>
    %2 = tpu.matmul %0, %1, %cst {dimension_numbers = #tpu.dot_dimension_numbers<[1], [0], [0], [1], [0, 0, 1, 1], [], []>} : vector<64x288xbf16>, vector<288x128xbf16>, vector<64x128xf32> -> vector<64x128xf32>
    %c0_3 = arith.constant 0 : index
    %c0_4 = arith.constant 0 : index
    %3 = vector.load %arg2[%c0_3, %c0_4] : memref<64x1xf32, #tpu.memory_space<vmem>>, vector<64x1xf32>
    %4 = vector.broadcast %3 : vector<64x1xf32> to vector<64x128xf32>
    %5 = arith.addf %2, %4 : vector<64x128xf32>
    %cst_5 = arith.constant 0.000000e+00 : f32
    %6 = vector.broadcast %cst_5 : f32 to vector<64x128xf32>
    %7 = arith.maximumf %5, %6 : vector<64x128xf32>
    %8 = arith.truncf %7 : vector<64x128xf32> to vector<64x128xbf16>
    %c0_6 = arith.constant 0 : index
    %c0_7 = arith.constant 0 : index
    %9 = vector.load %arg4[%c0_6, %c0_7] : memref<64x128xbf16, #tpu.memory_space<vmem>>, vector<64x128xbf16>
    tpu.vector_store %arg4[%c0_6, %c0_7], %8 {strides = array<i32>} : memref<64x128xbf16, #tpu.memory_space<vmem>>, vector<64x128xbf16>,
    return
  }
  func.func @transform_0(%arg0: i32) -> (i32, i32) {
    %c0_i32 = arith.constant 0 : i32
    %c0_i32_0 = arith.constant 0 : i32
    %c0_i32_1 = arith.constant 0 : i32
    return %c0_i32, %c0_i32_0 : i32, i32
  }
  func.func @transform_1(%arg0: i32) -> (i32, i32) {
    %c0_i32 = arith.constant 0 : i32
    %c0_i32_0 = arith.constant 0 : i32
    %c0_i32_1 = arith.constant 0 : i32
    return %c0_i32, %c0_i32_0 : i32, i32
  }
  func.func @transform_2(%arg0: i32) -> (i32, i32) {
    %c0_i32 = arith.constant 0 : i32
    %c0_i32_0 = arith.constant 0 : i32
    return %c0_i32, %arg0 : i32, i32
  }
  func.func @transform_3(%arg0: i32) -> (i32, i32) {
    %c0_i32 = arith.constant 0 : i32
    %c0_i32_0 = arith.constant 0 : i32
    return %c0_i32, %arg0 : i32, i32
  }
}

module attributes {stable_mosaic.version = 11 : i64} {
  func.func @_cgemm_kernel(%arg0: i32, %arg1: memref<32x144xbf16, #tpu.memory_space<vmem>>, %arg2: memref<32x1xf32, #tpu.memory_space<vmem>>, %arg3: memref<144x128xbf16, #tpu.memory_space<vmem>>, %arg4: memref<32x128xbf16, #tpu.memory_space<vmem>>) attributes {dimension_semantics = [#tpu.dimension_semantics<parallel>], iteration_bounds = array<i64: 1>, scalar_prefetch = 0 : i64, scratch_operands = 0 : i64, tpu.core_type = #tpu.core_type<tc>, window_params = [{pipeline_mode = #tpu.pipeline_mode<synchronous>, transform_indices = @transform_0, window_bounds = array<i64: 32, 144>}, {pipeline_mode = #tpu.pipeline_mode<synchronous>, transform_indices = @transform_1, window_bounds = array<i64: 32, 1>}, {transform_indices = @transform_2, window_bounds = array<i64: 144, 128>}, {transform_indices = @transform_3, window_bounds = array<i64: 32, 128>}]} {
    %c0 = arith.constant 0 : index
    %c0_0 = arith.constant 0 : index
    %0 = vector.load %arg1[%c0, %c0_0] : memref<32x144xbf16, #tpu.memory_space<vmem>>, vector<32x144xbf16>
    %c0_1 = arith.constant 0 : index
    %c0_2 = arith.constant 0 : index
    %1 = vector.load %arg3[%c0_1, %c0_2] : memref<144x128xbf16, #tpu.memory_space<vmem>>, vector<144x128xbf16>
    %cst = arith.constant dense<0.000000e+00> : vector<32x128xf32>
    %2 = tpu.matmul %0, %1, %cst {dimension_numbers = #tpu.dot_dimension_numbers<[1], [0], [0], [1], [0, 0, 1, 1], [], []>} : vector<32x144xbf16>, vector<144x128xbf16>, vector<32x128xf32> -> vector<32x128xf32>
    %c0_3 = arith.constant 0 : index
    %c0_4 = arith.constant 0 : index
    %3 = vector.load %arg2[%c0_3, %c0_4] : memref<32x1xf32, #tpu.memory_space<vmem>>, vector<32x1xf32>
    %4 = vector.broadcast %3 : vector<32x1xf32> to vector<32x128xf32>
    %5 = arith.addf %2, %4 : vector<32x128xf32>
    %cst_5 = arith.constant 0.000000e+00 : f32
    %6 = vector.broadcast %cst_5 : f32 to vector<32x128xf32>
    %7 = arith.maximumf %5, %6 : vector<32x128xf32>
    %8 = arith.truncf %7 : vector<32x128xf32> to vector<32x128xbf16>
    %c0_6 = arith.constant 0 : index
    %c0_7 = arith.constant 0 : index
    %9 = vector.load %arg4[%c0_6, %c0_7] : memref<32x128xbf16, #tpu.memory_space<vmem>>, vector<32x128xbf16>
    tpu.vector_store %arg4[%c0_6, %c0_7], %8 {strides = array<i32>} : memref<32x128xbf16, #tpu.memory_space<vmem>>, vector<32x128xbf16>,
    return
  }
  func.func @transform_0(%arg0: i32) -> (i32, i32) {
    %c0_i32 = arith.constant 0 : i32
    %c0_i32_0 = arith.constant 0 : i32
    %c0_i32_1 = arith.constant 0 : i32
    return %c0_i32, %c0_i32_0 : i32, i32
  }
  func.func @transform_1(%arg0: i32) -> (i32, i32) {
    %c0_i32 = arith.constant 0 : i32
    %c0_i32_0 = arith.constant 0 : i32
    %c0_i32_1 = arith.constant 0 : i32
    return %c0_i32, %c0_i32_0 : i32, i32
  }
  func.func @transform_2(%arg0: i32) -> (i32, i32) {
    %c0_i32 = arith.constant 0 : i32
    %c0_i32_0 = arith.constant 0 : i32
    return %c0_i32, %arg0 : i32, i32
  }
  func.func @transform_3(%arg0: i32) -> (i32, i32) {
    %c0_i32 = arith.constant 0 : i32
    %c0_i32_0 = arith.constant 0 : i32
    return %c0_i32, %arg0 : i32, i32
  }
}

module attributes {stable_mosaic.version = 11 : i64} {
  func.func @_cgemm_kernel(%arg0: i32, %arg1: memref<8x80xbf16, #tpu.memory_space<vmem>>, %arg2: memref<8x1xf32, #tpu.memory_space<vmem>>, %arg3: memref<80x128xbf16, #tpu.memory_space<vmem>>, %arg4: memref<8x128xf32, #tpu.memory_space<vmem>>) attributes {dimension_semantics = [#tpu.dimension_semantics<parallel>], iteration_bounds = array<i64: 1>, scalar_prefetch = 0 : i64, scratch_operands = 0 : i64, tpu.core_type = #tpu.core_type<tc>, window_params = [{pipeline_mode = #tpu.pipeline_mode<synchronous>, transform_indices = @transform_0, window_bounds = array<i64: 8, 80>}, {pipeline_mode = #tpu.pipeline_mode<synchronous>, transform_indices = @transform_1, window_bounds = array<i64: 8, 1>}, {transform_indices = @transform_2, window_bounds = array<i64: 80, 128>}, {transform_indices = @transform_3, window_bounds = array<i64: 8, 128>}]} {
    %c0 = arith.constant 0 : index
    %c0_0 = arith.constant 0 : index
    %0 = vector.load %arg1[%c0, %c0_0] : memref<8x80xbf16, #tpu.memory_space<vmem>>, vector<8x80xbf16>
    %c0_1 = arith.constant 0 : index
    %c0_2 = arith.constant 0 : index
    %1 = vector.load %arg3[%c0_1, %c0_2] : memref<80x128xbf16, #tpu.memory_space<vmem>>, vector<80x128xbf16>
    %cst = arith.constant dense<0.000000e+00> : vector<8x128xf32>
    %2 = tpu.matmul %0, %1, %cst {dimension_numbers = #tpu.dot_dimension_numbers<[1], [0], [0], [1], [0, 0, 1, 1], [], []>} : vector<8x80xbf16>, vector<80x128xbf16>, vector<8x128xf32> -> vector<8x128xf32>
    %c0_3 = arith.constant 0 : index
    %c0_4 = arith.constant 0 : index
    %3 = vector.load %arg2[%c0_3, %c0_4] : memref<8x1xf32, #tpu.memory_space<vmem>>, vector<8x1xf32>
    %4 = vector.broadcast %3 : vector<8x1xf32> to vector<8x128xf32>
    %5 = arith.addf %2, %4 : vector<8x128xf32>
    %c0_5 = arith.constant 0 : index
    %c0_6 = arith.constant 0 : index
    %6 = vector.load %arg4[%c0_5, %c0_6] : memref<8x128xf32, #tpu.memory_space<vmem>>, vector<8x128xf32>
    tpu.vector_store %arg4[%c0_5, %c0_6], %5 {strides = array<i32>} : memref<8x128xf32, #tpu.memory_space<vmem>>, vector<8x128xf32>,
    return
  }
  func.func @transform_0(%arg0: i32) -> (i32, i32) {
    %c0_i32 = arith.constant 0 : i32
    %c0_i32_0 = arith.constant 0 : i32
    %c0_i32_1 = arith.constant 0 : i32
    return %c0_i32, %c0_i32_0 : i32, i32
  }
  func.func @transform_1(%arg0: i32) -> (i32, i32) {
    %c0_i32 = arith.constant 0 : i32
    %c0_i32_0 = arith.constant 0 : i32
    %c0_i32_1 = arith.constant 0 : i32
    return %c0_i32, %c0_i32_0 : i32, i32
  }
  func.func @transform_2(%arg0: i32) -> (i32, i32) {
    %c0_i32 = arith.constant 0 : i32
    %c0_i32_0 = arith.constant 0 : i32
    return %c0_i32, %arg0 : i32, i32
  }
  func.func @transform_3(%arg0: i32) -> (i32, i32) {
    %c0_i32 = arith.constant 0 : i32
    %c0_i32_0 = arith.constant 0 : i32
    return %c0_i32, %arg0 : i32, i32
  }
}

</mosaic_0001>

<llo_original>
// kernel: net6_forward.6
$region0: #{net6_forward.6}
  #allocation0 [shape = 'u32[]', space=smem, size = 0x4, offset = 0x4, fixed_abs, tag = 'smem constant byte address 0x4 - core index']
  #allocation1 [shape = 'u32[144,128]{1,0:T(1,128)}', space=vmem, size = 0x12000, scoped, tag = 'internal scratch']
  %s0 = inlined_call_operand.vmem [shape: bf16[8,32], index: 0, kind: input, shape index: {}]
  %s1 = inlined_call_operand.vmem [shape: f32[8,1], index: 1, kind: input, shape index: {}]
  %s2 = inlined_call_operand.vmem [shape: bf16[32,128], index: 2, kind: input, shape index: {}]
  %s3 = inlined_call_operand.vmem [shape: bf16[8,128], index: 3, kind: output, shape index: {}]
  %s4 = sld [smem:[#allocation0]]
  $region22: #{net6_forward.6} parent=0
    _
  %s6 = ssub.s32 1, %s4
  %s7 = scalar_select 0, %s6, %s4
  // Predicated region
  $region2: #{net6_forward.6} parent=0 // pred_check
    _
  $region3: #{net6_forward.6} parent=0 // pred_check_branch
    %9 = sbr.rel (0) target = $region5
  $region4: #{net6_forward.6} parent=0 // pred_region
    _
  $region5: #{net6_forward.6} parent=0 // pred_fallthru
    _
  // Predicated region
  $region6: #{net6_forward.6} parent=0 // pred_check
    _
  $region7: #{net6_forward.6} parent=0 // pred_check_branch
    %11 = sbr.rel (0) target = $region9
  $region8: #{net6_forward.6} parent=0 // pred_region
    _
  $region9: #{net6_forward.6} parent=0 // pred_fallthru
    _
  // Predicated region
  $region10: #{net6_forward.6} parent=0 // pred_check
    _
  $region11: #{net6_forward.6} parent=0 // pred_check_branch
    %13 = sbr.rel (0) target = $region13
  $region12: #{net6_forward.6} parent=0 // pred_region
    _
  $region13: #{net6_forward.6} parent=0 // pred_fallthru
    _
  %v15 = vld [vmem:[%s0] sm:$0xf]
  %v16 = vld [vmem:[%s2] sm:$0xf]
  %v17 = vld [vmem:[%s2 + $0x4] sm:$0xf]
  %v18 = vld [vmem:[%s2 + $0x8] sm:$0xf]
  %v19 = vld [vmem:[%s2 + $0xc] sm:$0xf]
  %v20 = vld [vmem:[%s1] sm:$0xff]
  %22 = vset.pattern.permute.xlu0 0
  %23 = vperm.xlu0 %22, %v20
  %v24 = vpop.permute.xlu0 %23
  %v30 = vunpack.c.l.b16 %v16
  %v31 = vunpack.c.l.b16 %v17
  %v32 = vunpack.c.l.b16 %v18
  %v33 = vunpack.c.l.b16 %v19
  %v34 = vpack.c.b16 %v31, %v30
  %v35 = vpack.c.b16 %v33, %v32
  %vm38 = vcmask 261120
  %v40 = vsel %vm38, %v15, 0
  %42 = vmatprep.subr.bf16.mxu0 0
  %43 = vmatpush1.bf16.msra.mxu0 %v34
  %44 = vmatprep.subr.bf16.mxu0 0
  %45 = vmatpush1.bf16.msra.mxu0 %v35
  %46 = vmatprep.subr.bf16.mxu0 0
  %47 = vmatpush1.bf16.msra.mxu0 0
  %48 = vmatprep.subr.bf16.mxu0 0
  %49 = vmatpush1.bf16.msra.mxu0 0
  %50 = vmatprep.subr.bf16.mxu0 0
  %51 = vmatpush1.bf16.msra.mxu0 0
  %52 = vmatprep.subr.bf16.mxu0 0
  %53 = vmatpush1.bf16.msra.mxu0 0
  %54 = vmatprep.subr.bf16.mxu0 0
  %55 = vmatpush1.bf16.msra.mxu0 0
  %56 = vmatprep.subr.bf16.mxu0 0
  %57 = vmatpush1.bf16.msra.mxu0 0
  %58 = vmatprep.subr.bf16.mxu0 0
  %59 = vmatpush1.bf16.msra.mxu0 0
  %60 = vmatprep.subr.bf16.mxu0 0
  %61 = vmatpush1.bf16.msra.mxu0 0
  %62 = vmatprep.subr.bf16.mxu0 0
  %63 = vmatpush1.bf16.msra.mxu0 0
  %64 = vmatprep.subr.bf16.mxu0 0
  %65 = vmatpush1.bf16.msra.mxu0 0
  %66 = vmatprep.subr.bf16.mxu0 0
  %67 = vmatpush1.bf16.msra.mxu0 0
  %68 = vmatprep.subr.bf16.mxu0 0
  %69 = vmatpush1.bf16.msra.mxu0 0
  %70 = vmatprep.subr.bf16.mxu0 0
  %71 = vmatpush1.bf16.msra.mxu0 0
  %72 = vmatprep.subr.bf16.mxu0 0
  %73 = vmatpush1.bf16.msra.mxu0 0
  %74 = vmatprep.mubr.bf16.mxu0 0
  %75 = vmatmul.mubr.bf16.gmra.mrb[0].mxu0 %v40
  %v76 = vpop.f32.mrb[0].mxu0
  %v77 = vadd.f32 %v24, %v76
  %v78 = vpop.f32.mrb[0].mxu0
  %v79 = vpop.f32.mrb[0].mxu0
  %v80 = vpop.f32.mrb[0].mxu0
  %81 = vdwg.mxu0
  %v82 = vmax.f32 %v77, 0.0
  %v83 = vpack.c.bf16 %v82, %v82
  %84 = vst [vmem:[%s3] sm:$0xf] %v83
  // Predicated region
  $region14: #{net6_forward.6} parent=0 // pred_check
    _
  $region15: #{net6_forward.6} parent=0 // pred_check_branch
    %86 = sbr.rel (0) target = $region17
  $region16: #{net6_forward.6} parent=0 // pred_region
    _
  $region17: #{net6_forward.6} parent=0 // pred_fallthru
    _
  // Predicated region
  $region18: #{net6_forward.6} parent=0 // pred_check
    _
  $region19: #{net6_forward.6} parent=0 // pred_check_branch
    %88 = sbr.rel (0) target = $region21
  $region20: #{net6_forward.6} parent=0 // pred_region
    _
  $region21: #{net6_forward.6} parent=0 // pred_fallthru
    _

// kernel: net6_forward.7
$region0: #{net6_forward.7}
  #allocation0 [shape = 'u32[]', space=smem, size = 0x4, offset = 0x4, fixed_abs, tag = 'smem constant byte address 0x4 - core index']
  #allocation1 [shape = 'u32[144,128]{1,0:T(1,128)}', space=vmem, size = 0x12000, scoped, tag = 'internal scratch']
  %s0 = inlined_call_operand.vmem [shape: bf16[16,80], index: 0, kind: input, shape index: {}]
  %s1 = inlined_call_operand.vmem [shape: f32[16,1], index: 1, kind: input, shape index: {}]
  %s2 = inlined_call_operand.vmem [shape: bf16[80,32], index: 2, kind: input, shape index: {}]
  %s3 = inlined_call_operand.vmem [shape: bf16[16,32], index: 3, kind: output, shape index: {}]
  %s4 = sld [smem:[#allocation0]]
  $region22: #{net6_forward.7} parent=0
    _
  %s6 = ssub.s32 1, %s4
  %s7 = scalar_select 0, %s6, %s4
  // Predicated region
  $region2: #{net6_forward.7} parent=0 // pred_check
    _
  $region3: #{net6_forward.7} parent=0 // pred_check_branch
    %9 = sbr.rel (0) target = $region5
  $region4: #{net6_forward.7} parent=0 // pred_region
    _
  $region5: #{net6_forward.7} parent=0 // pred_fallthru
    _
  // Predicated region
  $region6: #{net6_forward.7} parent=0 // pred_check
    _
  $region7: #{net6_forward.7} parent=0 // pred_check_branch
    %11 = sbr.rel (0) target = $region9
  $region8: #{net6_forward.7} parent=0 // pred_region
    _
  $region9: #{net6_forward.7} parent=0 // pred_fallthru
    _
  // Predicated region
  $region10: #{net6_forward.7} parent=0 // pred_check
    _
  $region11: #{net6_forward.7} parent=0 // pred_check_branch
    %13 = sbr.rel (0) target = $region13
  $region12: #{net6_forward.7} parent=0 // pred_region
    _
  $region13: #{net6_forward.7} parent=0 // pred_fallthru
    _
  %v15 = vld [vmem:[%s0] sm:$0xf]
  %v16 = vld [vmem:[%s0 + $0x4] sm:$0xf]
  %v17 = vld [vmem:[%s2] sm:$0xf]
  %v18 = vld [vmem:[%s2 + $0x4] sm:$0xf]
  %v19 = vld [vmem:[%s2 + $0x8] sm:$0xf]
  %v20 = vld [vmem:[%s2 + $0xc] sm:$0xf]
  %v21 = vld [vmem:[%s2 + $0x10] sm:$0xf]
  %v22 = vld [vmem:[%s2 + $0x14] sm:$0xf]
  %v23 = vld [vmem:[%s2 + $0x18] sm:$0xf]
  %v24 = vld [vmem:[%s2 + $0x1c] sm:$0xf]
  %v25 = vld [vmem:[%s2 + $0x20] sm:$0xf]
  %v26 = vld [vmem:[%s2 + $0x24] sm:$0xf]
  %v27 = vld [vmem:[%s1] sm:$0xff]
  %v28 = vld [vmem:[%s1 + $0x8] sm:$0xff]
  %30 = vset.pattern.permute.xlu0 0
  %31 = vperm.xlu0 %30, %v27
  %v32 = vpop.permute.xlu0 %31
  %35 = vset.pattern.permute.xlu0 0
  %36 = vperm.xlu0 %35, %v28
  %v37 = vpop.permute.xlu0 %36
  %v41 = vunpack.c.l.b16 %v15
  %v42 = vunpack.c.l.b16 %v16
  %v43 = vpack.c.b16 %v42, %v41
  %v54 = vunpack.c.l.b16 %v17
  %v55 = vunpack.c.l.b16 %v18
  %v56 = vunpack.c.l.b16 %v19
  %v57 = vunpack.c.l.b16 %v20
  %v58 = vunpack.c.l.b16 %v21
  %v59 = vunpack.c.l.b16 %v22
  %v60 = vunpack.c.l.b16 %v23
  %v61 = vunpack.c.l.b16 %v24
  %v62 = vunpack.c.l.b16 %v25
  %v63 = vunpack.c.l.b16 %v26
  %v64 = vpack.c.b16 %v55, %v54
  %v65 = vpack.c.b16 %v57, %v56
  %v66 = vpack.c.b16 %v59, %v58
  %v67 = vpack.c.b16 %v61, %v60
  %v68 = vpack.c.b16 %v63, %v62
  %vm74 = vcmask 654336
  %v76 = vsel %vm74, %v43, 0
  %78 = vmatprep.subr.bf16.mxu0 0
  %79 = vmatpush1.bf16.msra.mxu0 %v64
  %80 = vmatprep.subr.bf16.mxu0 0
  %81 = vmatpush1.bf16.msra.mxu0 %v65
  %82 = vmatprep.subr.bf16.mxu0 0
  %83 = vmatpush1.bf16.msra.mxu0 %v66
  %84 = vmatprep.subr.bf16.mxu0 0
  %85 = vmatpush1.bf16.msra.mxu0 %v67
  %86 = vmatprep.subr.bf16.mxu0 0
  %87 = vmatpush1.bf16.msra.mxu0 %v68
  %88 = vmatprep.subr.bf16.mxu0 0
  %89 = vmatpush1.bf16.msra.mxu0 0
  %90 = vmatprep.subr.bf16.mxu0 0
  %91 = vmatpush1.bf16.msra.mxu0 0
  %92 = vmatprep.subr.bf16.mxu0 0
  %93 = vmatpush1.bf16.msra.mxu0 0
  %94 = vmatprep.subr.bf16.mxu0 0
  %95 = vmatpush1.bf16.msra.mxu0 0
  %96 = vmatprep.subr.bf16.mxu0 0
  %97 = vmatpush1.bf16.msra.mxu0 0
  %98 = vmatprep.subr.bf16.mxu0 0
  %99 = vmatpush1.bf16.msra.mxu0 0
  %100 = vmatprep.subr.bf16.mxu0 0
  %101 = vmatpush1.bf16.msra.mxu0 0
  %102 = vmatprep.subr.bf16.mxu0 0
  %103 = vmatpush1.bf16.msra.mxu0 0
  %104 = vmatprep.subr.bf16.mxu0 0
  %105 = vmatpush1.bf16.msra.mxu0 0
  %106 = vmatprep.subr.bf16.mxu0 0
  %107 = vmatpush1.bf16.msra.mxu0 0
  %108 = vmatprep.subr.bf16.mxu0 0
  %109 = vmatpush1.bf16.msra.mxu0 0
  %110 = vmatprep.mubr.bf16.mxu0 0
  %111 = vmatmul.mubr.bf16.gmra.mrb[0].mxu0 %v76
  %v112 = vpop.f32.mrb[0].mxu0
  %v113 = vadd.f32 %v32, %v112
  %v114 = vpop.f32.mrb[0].mxu0
  %v115 = vpop.f32.mrb[0].mxu0
  %v116 = vadd.f32 %v37, %v115
  %v117 = vpop.f32.mrb[0].mxu0
  %118 = vdwg.mxu0
  %v119 = vmax.f32 %v113, 0.0
  %v120 = vmax.f32 %v116, 0.0
  %v121 = vpack.c.bf16 %v120, %v119
  %v123 = vunpack.c.l.b16 %v121
  %v124 = vunpack.c.h.b16 %v121
  %v125 = vpack.c.b16 %v123, %v123
  %v126 = vpack.c.b16 %v124, %v124
  %129 = vst [vmem:[%s3] sm:$0xf] %v125
  %130 = vst [vmem:[%s3 + $0x4] sm:$0xf] %v126
  // Predicated region
  $region14: #{net6_forward.7} parent=0 // pred_check
    _
  $region15: #{net6_forward.7} parent=0 // pred_check_branch
    %132 = sbr.rel (0) target = $region17
  $region16: #{net6_forward.7} parent=0 // pred_region
    _
  $region17: #{net6_forward.7} parent=0 // pred_fallthru
    _
  // Predicated region
  $region18: #{net6_forward.7} parent=0 // pred_check
    _
  $region19: #{net6_forward.7} parent=0 // pred_check_branch
    %134 = sbr.rel (0) target = $region21
  $region20: #{net6_forward.7} parent=0 // pred_region
    _
  $region21: #{net6_forward.7} parent=0 // pred_fallthru
    _

// kernel: net6_forward.8
$region0: #{net6_forward.8}
  #allocation0 [shape = 'u32[]', space=smem, size = 0x4, offset = 0x4, fixed_abs, tag = 'smem constant byte address 0x4 - core index']
  #allocation1 [shape = 'u32[144,128]{1,0:T(1,128)}', space=vmem, size = 0x12000, scoped, tag = 'internal scratch']
  %s0 = inlined_call_operand.vmem [shape: bf16[32,144], index: 0, kind: input, shape index: {}]
  %s1 = inlined_call_operand.vmem [shape: f32[32,1], index: 1, kind: input, shape index: {}]
  %s2 = inlined_call_operand.vmem [shape: bf16[144,8], index: 2, kind: input, shape index: {}]
  %s3 = inlined_call_operand.vmem [shape: bf16[32,8], index: 3, kind: output, shape index: {}]
  %s4 = sld [smem:[#allocation0]]
  $region22: #{net6_forward.8} parent=0
    _
  %s6 = ssub.s32 1, %s4
  %s7 = scalar_select 0, %s6, %s4
  // Predicated region
  $region2: #{net6_forward.8} parent=0 // pred_check
    _
  $region3: #{net6_forward.8} parent=0 // pred_check_branch
    %9 = sbr.rel (0) target = $region5
  $region4: #{net6_forward.8} parent=0 // pred_region
    _
  $region5: #{net6_forward.8} parent=0 // pred_fallthru
    _
  // Predicated region
  $region6: #{net6_forward.8} parent=0 // pred_check
    _
  $region7: #{net6_forward.8} parent=0 // pred_check_branch
    %11 = sbr.rel (0) target = $region9
  $region8: #{net6_forward.8} parent=0 // pred_region
    _
  $region9: #{net6_forward.8} parent=0 // pred_fallthru
    _
  // Predicated region
  $region10: #{net6_forward.8} parent=0 // pred_check
    _
  $region11: #{net6_forward.8} parent=0 // pred_check_branch
    %13 = sbr.rel (0) target = $region13
  $region12: #{net6_forward.8} parent=0 // pred_region
    _
  $region13: #{net6_forward.8} parent=0 // pred_fallthru
    _
  %v15 = vld [vmem:[%s0] sm:$0xff]
  %v16 = vld [vmem:[%s0 + $0x8] sm:$0xff]
  %v17 = vld [vmem:[%s0 + $0x10] sm:$0xff]
  %v18 = vld [vmem:[%s0 + $0x18] sm:$0xff]
  %v19 = vld [vmem:[%s2] sm:$0xf]
  %v20 = vld [vmem:[%s2 + $0x4] sm:$0xf]
  %v21 = vld [vmem:[%s2 + $0x8] sm:$0xf]
  %v22 = vld [vmem:[%s2 + $0xc] sm:$0xf]
  %v23 = vld [vmem:[%s2 + $0x10] sm:$0xf]
  %v24 = vld [vmem:[%s2 + $0x14] sm:$0xf]
  %v25 = vld [vmem:[%s2 + $0x18] sm:$0xf]
  %v26 = vld [vmem:[%s2 + $0x1c] sm:$0xf]
  %v27 = vld [vmem:[%s2 + $0x20] sm:$0xf]
  %v28 = vld [vmem:[%s2 + $0x24] sm:$0xf]
  %v29 = vld [vmem:[%s2 + $0x28] sm:$0xf]
  %v30 = vld [vmem:[%s2 + $0x2c] sm:$0xf]
  %v31 = vld [vmem:[%s2 + $0x30] sm:$0xf]
  %v32 = vld [vmem:[%s2 + $0x34] sm:$0xf]
  %v33 = vld [vmem:[%s2 + $0x38] sm:$0xf]
  %v34 = vld [vmem:[%s2 + $0x3c] sm:$0xf]
  %v35 = vld [vmem:[%s2 + $0x40] sm:$0xf]
  %v36 = vld [vmem:[%s2 + $0x44] sm:$0xf]
  %v37 = vld [vmem:[%s1] sm:$0xff]
  %v38 = vld [vmem:[%s1 + $0x8] sm:$0xff]
  %v39 = vld [vmem:[%s1 + $0x10] sm:$0xff]
  %v40 = vld [vmem:[%s1 + $0x18] sm:$0xff]
  %42 = vset.pattern.permute.xlu0 0
  %43 = vperm.xlu0 %42, %v37
  %v44 = vpop.permute.xlu0 %43
  %47 = vset.pattern.permute.xlu0 0
  %48 = vperm.xlu0 %47, %v38
  %v49 = vpop.permute.xlu0 %48
  %52 = vset.pattern.permute.xlu0 0
  %53 = vperm.xlu0 %52, %v39
  %v54 = vpop.permute.xlu0 %53
  %57 = vset.pattern.permute.xlu0 0
  %58 = vperm.xlu0 %57, %v40
  %v59 = vpop.permute.xlu0 %58
  %v65 = vunpack.c.l.b16 %v15
  %v66 = vunpack.c.h.b16 %v15
  %v67 = vunpack.c.l.b16 %v16
  %v68 = vunpack.c.h.b16 %v16
  %v69 = vunpack.c.l.b16 %v17
  %v70 = vunpack.c.h.b16 %v17
  %v71 = vunpack.c.l.b16 %v18
  %v72 = vunpack.c.h.b16 %v18
  %v73 = vpack.c.b16 %v67, %v65
  %v74 = vpack.c.b16 %v68, %v66
  %v75 = vpack.c.b16 %v71, %v69
  %v76 = vpack.c.b16 %v72, %v70
  %v97 = vunpack.c.l.b16 %v19
  %v98 = vunpack.c.l.b16 %v20
  %v99 = vunpack.c.l.b16 %v21
  %v100 = vunpack.c.l.b16 %v22
  %v101 = vunpack.c.l.b16 %v23
  %v102 = vunpack.c.l.b16 %v24
  %v103 = vunpack.c.l.b16 %v25
  %v104 = vunpack.c.l.b16 %v26
  %v105 = vunpack.c.l.b16 %v27
  %v106 = vunpack.c.l.b16 %v28
  %v107 = vunpack.c.l.b16 %v29
  %v108 = vunpack.c.l.b16 %v30
  %v109 = vunpack.c.l.b16 %v31
  %v110 = vunpack.c.l.b16 %v32
  %v111 = vunpack.c.l.b16 %v33
  %v112 = vunpack.c.l.b16 %v34
  %v113 = vunpack.c.l.b16 %v35
  %v114 = vunpack.c.l.b16 %v36
  %v115 = vpack.c.b16 %v98, %v97
  %v116 = vpack.c.b16 %v100, %v99
  %v117 = vpack.c.b16 %v102, %v101
  %v118 = vpack.c.b16 %v104, %v103
  %v119 = vpack.c.b16 %v106, %v105
  %v120 = vpack.c.b16 %v108, %v107
  %v121 = vpack.c.b16 %v110, %v109
  %v122 = vpack.c.b16 %v112, %v111
  %v123 = vpack.c.b16 %v114, %v113
  %vm133 = vcmask 130048
  %v135 = vsel %vm133, %v74, 0
  %v138 = vsel %vm133, %v76, 0
  %140 = vmatprep.subr.bf16.mxu0 0
  %141 = vmatpush1.bf16.msra.mxu0 %v115
  %142 = vmatprep.subr.bf16.mxu0 0
  %143 = vmatpush1.bf16.msra.mxu0 %v116
  %144 = vmatprep.subr.bf16.mxu0 0
  %145 = vmatpush1.bf16.msra.mxu0 %v117
  %146 = vmatprep.subr.bf16.mxu0 0
  %147 = vmatpush1.bf16.msra.mxu0 %v118
  %148 = vmatprep.subr.bf16.mxu0 0
  %149 = vmatpush1.bf16.msra.mxu0 %v119
  %150 = vmatprep.subr.bf16.mxu0 0
  %151 = vmatpush1.bf16.msra.mxu0 %v120
  %152 = vmatprep.subr.bf16.mxu0 0
  %153 = vmatpush1.bf16.msra.mxu0 %v121
  %154 = vmatprep.subr.bf16.mxu0 0
  %155 = vmatpush1.bf16.msra.mxu0 %v122
  %156 = vmatprep.subr.bf16.mxu0 0
  %157 = vmatpush1.bf16.msra.mxu0 %v123
  %158 = vmatprep.subr.bf16.mxu0 0
  %159 = vmatpush1.bf16.msra.mxu0 0
  %160 = vmatprep.subr.bf16.mxu0 0
  %161 = vmatpush1.bf16.msra.mxu0 0
  %162 = vmatprep.subr.bf16.mxu0 0
  %163 = vmatpush1.bf16.msra.mxu0 0
  %164 = vmatprep.subr.bf16.mxu0 0
  %165 = vmatpush1.bf16.msra.mxu0 0
  %166 = vmatprep.subr.bf16.mxu0 0
  %167 = vmatpush1.bf16.msra.mxu0 0
  %168 = vmatprep.subr.bf16.mxu0 0
  %169 = vmatpush1.bf16.msra.mxu0 0
  %170 = vmatprep.subr.bf16.mxu0 0
  %171 = vmatpush1.bf16.msra.mxu0 0
  %172 = vmatprep.mubr.bf16.mxu0 %v135
  %173 = vmatmul.mubr.bf16.gmra.mrb[0].mxu0 %v73
  %v174 = vpop.f32.mrb[0].mxu0
  %v175 = vadd.f32 %v44, %v174
  %v176 = vpop.f32.mrb[0].mxu0
  %v177 = vpop.f32.mrb[0].mxu0
  %v178 = vadd.f32 %v49, %v177
  %v179 = vpop.f32.mrb[0].mxu0
  %180 = vmatprep.mubr.bf16.mxu0 %v138
  %181 = vmatmul.mubr.bf16.gmra.mrb[0].mxu0 %v75
  %v182 = vpop.f32.mrb[0].mxu0
  %v183 = vadd.f32 %v54, %v182
  %v184 = vpop.f32.mrb[0].mxu0
  %v185 = vpop.f32.mrb[0].mxu0
  %v186 = vadd.f32 %v59, %v185
  %v187 = vpop.f32.mrb[0].mxu0
  %188 = vdwg.mxu0
  %v189 = vmax.f32 %v175, 0.0
  %v190 = vmax.f32 %v178, 0.0
  %v191 = vmax.f32 %v183, 0.0
  %v192 = vmax.f32 %v186, 0.0
  %v193 = vpack.c.bf16 %v190, %v189
  %v194 = vpack.c.bf16 %v192, %v191
  %v197 = vunpack.c.l.b16 %v193
  %v198 = vunpack.c.h.b16 %v193
  %v199 = vunpack.c.l.b16 %v194
  %v200 = vunpack.c.h.b16 %v194
  %v201 = vpack.c.b16 %v197, %v197
  %v202 = vpack.c.b16 %v198, %v198
  %v203 = vpack.c.b16 %v199, %v199
  %v204 = vpack.c.b16 %v200, %v200
  %209 = vst [vmem:[%s3] sm:$0xf] %v201
  %210 = vst [vmem:[%s3 + $0x4] sm:$0xf] %v202
  %211 = vst [vmem:[%s3 + $0x8] sm:$0xf] %v203
  %212 = vst [vmem:[%s3 + $0xc] sm:$0xf] %v204
  // Predicated region
  $region14: #{net6_forward.8} parent=0 // pred_check
    _
  $region15: #{net6_forward.8} parent=0 // pred_check_branch
    %214 = sbr.rel (0) target = $region17
  $region16: #{net6_forward.8} parent=0 // pred_region
    _
  $region17: #{net6_forward.8} parent=0 // pred_fallthru
    _
  // Predicated region
  $region18: #{net6_forward.8} parent=0 // pred_check
    _
  $region19: #{net6_forward.8} parent=0 // pred_check_branch
    %216 = sbr.rel (0) target = $region21
  $region20: #{net6_forward.8} parent=0 // pred_region
    _
  $region21: #{net6_forward.8} parent=0 // pred_fallthru
    _

// kernel: net6_forward.9
$region0: #{net6_forward.9}
  #allocation0 [shape = 'u32[]', space=smem, size = 0x4, offset = 0x4, fixed_abs, tag = 'smem constant byte address 0x4 - core index']
  #allocation1 [shape = 'u32[144,128]{1,0:T(1,128)}', space=vmem, size = 0x12000, scoped, tag = 'internal scratch']
  %s0 = inlined_call_operand.vmem [shape: bf16[64,288], index: 0, kind: input, shape index: {}]
  %s1 = inlined_call_operand.vmem [shape: f32[64,1], index: 1, kind: input, shape index: {}]
  %s2 = inlined_call_operand.vmem [shape: bf16[288,8], index: 2, kind: input, shape index: {}]
  %s3 = inlined_call_operand.vmem [shape: bf16[64,8], index: 3, kind: output, shape index: {}]
  %s4 = sld [smem:[#allocation0]]
  $region22: #{net6_forward.9} parent=0
    _
  %s6 = ssub.s32 1, %s4
  %s7 = scalar_select 0, %s6, %s4
  // Predicated region
  $region2: #{net6_forward.9} parent=0 // pred_check
    _
  $region3: #{net6_forward.9} parent=0 // pred_check_branch
    %9 = sbr.rel (0) target = $region5
  $region4: #{net6_forward.9} parent=0 // pred_region
    _
  $region5: #{net6_forward.9} parent=0 // pred_fallthru
    _
  // Predicated region
  $region6: #{net6_forward.9} parent=0 // pred_check
    _
  $region7: #{net6_forward.9} parent=0 // pred_check_branch
    %11 = sbr.rel (0) target = $region9
  $region8: #{net6_forward.9} parent=0 // pred_region
    _
  $region9: #{net6_forward.9} parent=0 // pred_fallthru
    _
  // Predicated region
  $region10: #{net6_forward.9} parent=0 // pred_check
    _
  $region11: #{net6_forward.9} parent=0 // pred_check_branch
    %13 = sbr.rel (0) target = $region13
  $region12: #{net6_forward.9} parent=0 // pred_region
    _
  $region13: #{net6_forward.9} parent=0 // pred_fallthru
    _
  %v15 = vld [vmem:[%s0] sm:$0xff]
  %v16 = vld [vmem:[%s0 + $0x8] sm:$0xf]
  %v17 = vld [vmem:[%s0 + $0xc] sm:$0xff]
  %v18 = vld [vmem:[%s0 + $0x14] sm:$0xf]
  %v19 = vld [vmem:[%s0 + $0x18] sm:$0xff]
  %v20 = vld [vmem:[%s0 + $0x20] sm:$0xf]
  %v21 = vld [vmem:[%s0 + $0x24] sm:$0xff]
  %v22 = vld [vmem:[%s0 + $0x2c] sm:$0xf]
  %v23 = vld [vmem:[%s0 + $0x30] sm:$0xff]
  %v24 = vld [vmem:[%s0 + $0x38] sm:$0xf]
  %v25 = vld [vmem:[%s0 + $0x3c] sm:$0xff]
  %v26 = vld [vmem:[%s0 + $0x44] sm:$0xf]
  %v27 = vld [vmem:[%s0 + $0x48] sm:$0xff]
  %v28 = vld [vmem:[%s0 + $0x50] sm:$0xf]
  %v29 = vld [vmem:[%s0 + $0x54] sm:$0xff]
  %v30 = vld [vmem:[%s0 + $0x5c] sm:$0xf]
  %v31 = vld [vmem:[%s2] sm:$0xf]
  %v32 = vld [vmem:[%s2 + $0x4] sm:$0xf]
  %v33 = vld [vmem:[%s2 + $0x8] sm:$0xf]
  %v34 = vld [vmem:[%s2 + $0xc] sm:$0xf]
  %v35 = vld [vmem:[%s2 + $0x10] sm:$0xf]
  %v36 = vld [vmem:[%s2 + $0x14] sm:$0xf]
  %v37 = vld [vmem:[%s2 + $0x18] sm:$0xf]
  %v38 = vld [vmem:[%s2 + $0x1c] sm:$0xf]
  %v39 = vld [vmem:[%s2 + $0x20] sm:$0xf]
  %v40 = vld [vmem:[%s2 + $0x24] sm:$0xf]
  %v41 = vld [vmem:[%s2 + $0x28] sm:$0xf]
  %v42 = vld [vmem:[%s2 + $0x2c] sm:$0xf]
  %v43 = vld [vmem:[%s2 + $0x30] sm:$0xf]
  %v44 = vld [vmem:[%s2 + $0x34] sm:$0xf]
  %v45 = vld [vmem:[%s2 + $0x38] sm:$0xf]
  %v46 = vld [vmem:[%s2 + $0x3c] sm:$0xf]
  %v47 = vld [vmem:[%s2 + $0x40] sm:$0xf]
  %v48 = vld [vmem:[%s2 + $0x44] sm:$0xf]
  %v49 = vld [vmem:[%s2 + $0x48] sm:$0xf]
  %v50 = vld [vmem:[%s2 + $0x4c] sm:$0xf]
  %v51 = vld [vmem:[%s2 + $0x50] sm:$0xf]
  %v52 = vld [vmem:[%s2 + $0x54] sm:$0xf]
  %v53 = vld [vmem:[%s2 + $0x58] sm:$0xf]
  %v54 = vld [vmem:[%s2 + $0x5c] sm:$0xf]
  %v55 = vld [vmem:[%s2 + $0x60] sm:$0xf]
  %v56 = vld [vmem:[%s2 + $0x64] sm:$0xf]
  %v57 = vld [vmem:[%s2 + $0x68] sm:$0xf]
  %v58 = vld [vmem:[%s2 + $0x6c] sm:$0xf]
  %v59 = vld [vmem:[%s2 + $0x70] sm:$0xf]
  %v60 = vld [vmem:[%s2 + $0x74] sm:$0xf]
  %v61 = vld [vmem:[%s2 + $0x78] sm:$0xf]
  %v62 = vld [vmem:[%s2 + $0x7c] sm:$0xf]
  %v63 = vld [vmem:[%s2 + $0x80] sm:$0xf]
  %v64 = vld [vmem:[%s2 + $0x84] sm:$0xf]
  %v65 = vld [vmem:[%s2 + $0x88] sm:$0xf]
  %v66 = vld [vmem:[%s2 + $0x8c] sm:$0xf]
  %v67 = vld [vmem:[%s1] sm:$0xff]
  %v68 = vld [vmem:[%s1 + $0x8] sm:$0xff]
  %v69 = vld [vmem:[%s1 + $0x10] sm:$0xff]
  %v70 = vld [vmem:[%s1 + $0x18] sm:$0xff]
  %v71 = vld [vmem:[%s1 + $0x20] sm:$0xff]
  %v72 = vld [vmem:[%s1 + $0x28] sm:$0xff]
  %v73 = vld [vmem:[%s1 + $0x30] sm:$0xff]
  %v74 = vld [vmem:[%s1 + $0x38] sm:$0xff]
  %76 = vset.pattern.permute.xlu0 0
  %77 = vperm.xlu0 %76, %v67
  %v78 = vpop.permute.xlu0 %77
  %81 = vset.pattern.permute.xlu0 0
  %82 = vperm.xlu0 %81, %v68
  %v83 = vpop.permute.xlu0 %82
  %86 = vset.pattern.permute.xlu0 0
  %87 = vperm.xlu0 %86, %v69
  %v88 = vpop.permute.xlu0 %87
  %91 = vset.pattern.permute.xlu0 0
  %92 = vperm.xlu0 %91, %v70
  %v93 = vpop.permute.xlu0 %92
  %96 = vset.pattern.permute.xlu0 0
  %97 = vperm.xlu0 %96, %v71
  %v98 = vpop.permute.xlu0 %97
  %101 = vset.pattern.permute.xlu0 0
  %102 = vperm.xlu0 %101, %v72
  %v103 = vpop.permute.xlu0 %102
  %106 = vset.pattern.permute.xlu0 0
  %107 = vperm.xlu0 %106, %v73
  %v108 = vpop.permute.xlu0 %107
  %111 = vset.pattern.permute.xlu0 0
  %112 = vperm.xlu0 %111, %v74
  %v113 = vpop.permute.xlu0 %112
  %v131 = vunpack.c.l.b16 %v15
  %v132 = vunpack.c.h.b16 %v15
  %v133 = vunpack.c.l.b16 %v16
  %v134 = vunpack.c.l.b16 %v17
  %v135 = vunpack.c.h.b16 %v17
  %v136 = vunpack.c.l.b16 %v18
  %v137 = vunpack.c.l.b16 %v19
  %v138 = vunpack.c.h.b16 %v19
  %v139 = vunpack.c.l.b16 %v20
  %v140 = vunpack.c.l.b16 %v21
  %v141 = vunpack.c.h.b16 %v21
  %v142 = vunpack.c.l.b16 %v22
  %v143 = vunpack.c.l.b16 %v23
  %v144 = vunpack.c.h.b16 %v23
  %v145 = vunpack.c.l.b16 %v24
  %v146 = vunpack.c.l.b16 %v25
  %v147 = vunpack.c.h.b16 %v25
  %v148 = vunpack.c.l.b16 %v26
  %v149 = vunpack.c.l.b16 %v27
  %v150 = vunpack.c.h.b16 %v27
  %v151 = vunpack.c.l.b16 %v28
  %v152 = vunpack.c.l.b16 %v29
  %v153 = vunpack.c.h.b16 %v29
  %v154 = vunpack.c.l.b16 %v30
  %v155 = vpack.c.b16 %v134, %v131
  %v156 = vpack.c.b16 %v135, %v132
  %v157 = vpack.c.b16 %v136, %v133
  %v158 = vpack.c.b16 %v140, %v137
  %v159 = vpack.c.b16 %v141, %v138
  %v160 = vpack.c.b16 %v142, %v139
  %v161 = vpack.c.b16 %v146, %v143
  %v162 = vpack.c.b16 %v147, %v144
  %v163 = vpack.c.b16 %v148, %v145
  %v164 = vpack.c.b16 %v152, %v149
  %v165 = vpack.c.b16 %v153, %v150
  %v166 = vpack.c.b16 %v154, %v151
  %v211 = vunpack.c.l.b16 %v31
  %v212 = vunpack.c.l.b16 %v32
  %v213 = vunpack.c.l.b16 %v33
  %v214 = vunpack.c.l.b16 %v34
  %v215 = vunpack.c.l.b16 %v35
  %v216 = vunpack.c.l.b16 %v36
  %v217 = vunpack.c.l.b16 %v37
  %v218 = vunpack.c.l.b16 %v38
  %v219 = vunpack.c.l.b16 %v39
  %v220 = vunpack.c.l.b16 %v40
  %v221 = vunpack.c.l.b16 %v41
  %v222 = vunpack.c.l.b16 %v42
  %v223 = vunpack.c.l.b16 %v43
  %v224 = vunpack.c.l.b16 %v44
  %v225 = vunpack.c.l.b16 %v45
  %v226 = vunpack.c.l.b16 %v46
  %v227 = vunpack.c.l.b16 %v47
  %v228 = vunpack.c.l.b16 %v48
  %v229 = vunpack.c.l.b16 %v49
  %v230 = vunpack.c.l.b16 %v50
  %v231 = vunpack.c.l.b16 %v51
  %v232 = vunpack.c.l.b16 %v52
  %v233 = vunpack.c.l.b16 %v53
  %v234 = vunpack.c.l.b16 %v54
  %v235 = vunpack.c.l.b16 %v55
  %v236 = vunpack.c.l.b16 %v56
  %v237 = vunpack.c.l.b16 %v57
  %v238 = vunpack.c.l.b16 %v58
  %v239 = vunpack.c.l.b16 %v59
  %v240 = vunpack.c.l.b16 %v60
  %v241 = vunpack.c.l.b16 %v61
  %v242 = vunpack.c.l.b16 %v62
  %v243 = vunpack.c.l.b16 %v63
  %v244 = vunpack.c.l.b16 %v64
  %v245 = vunpack.c.l.b16 %v65
  %v246 = vunpack.c.l.b16 %v66
  %v247 = vpack.c.b16 %v212, %v211
  %v248 = vpack.c.b16 %v214, %v213
  %v249 = vpack.c.b16 %v216, %v215
  %v250 = vpack.c.b16 %v218, %v217
  %v251 = vpack.c.b16 %v220, %v219
  %v252 = vpack.c.b16 %v222, %v221
  %v253 = vpack.c.b16 %v224, %v223
  %v254 = vpack.c.b16 %v226, %v225
  %v255 = vpack.c.b16 %v228, %v227
  %v256 = vpack.c.b16 %v230, %v229
  %v257 = vpack.c.b16 %v232, %v231
  %v258 = vpack.c.b16 %v234, %v233
  %v259 = vpack.c.b16 %v236, %v235
  %v260 = vpack.c.b16 %v238, %v237
  %v261 = vpack.c.b16 %v240, %v239
  %v262 = vpack.c.b16 %v242, %v241
  %v263 = vpack.c.b16 %v244, %v243
  %v264 = vpack.c.b16 %v246, %v245
  %vm283 = vcmask 261120
  %v285 = vsel %vm283, %v157, 0
  %v288 = vsel %vm283, %v160, 0
  %v291 = vsel %vm283, %v163, 0
  %v294 = vsel %vm283, %v166, 0
  %296 = vmatprep.subr.bf16.mxu0 0
  %297 = vmatpush1.bf16.msra.mxu0 %v247
  %298 = vmatprep.subr.bf16.mxu0 0
  %299 = vmatpush1.bf16.msra.mxu0 %v248
  %300 = vmatprep.subr.bf16.mxu0 0
  %301 = vmatpush1.bf16.msra.mxu0 %v249
  %302 = vmatprep.subr.bf16.mxu0 0
  %303 = vmatpush1.bf16.msra.mxu0 %v250
  %304 = vmatprep.subr.bf16.mxu0 0
  %305 = vmatpush1.bf16.msra.mxu0 %v251
  %306 = vmatprep.subr.bf16.mxu0 0
  %307 = vmatpush1.bf16.msra.mxu0 %v252
  %308 = vmatprep.subr.bf16.mxu0 0
  %309 = vmatpush1.bf16.msra.mxu0 %v253
  %310 = vmatprep.subr.bf16.mxu0 0
  %311 = vmatpush1.bf16.msra.mxu0 %v254
  %312 = vmatprep.subr.bf16.mxu0 0
  %313 = vmatpush1.bf16.msra.mxu0 %v255
  %314 = vmatprep.subr.bf16.mxu0 0
  %315 = vmatpush1.bf16.msra.mxu0 %v256
  %316 = vmatprep.subr.bf16.mxu0 0
  %317 = vmatpush1.bf16.msra.mxu0 %v257
  %318 = vmatprep.subr.bf16.mxu0 0
  %319 = vmatpush1.bf16.msra.mxu0 %v258
  %320 = vmatprep.subr.bf16.mxu0 0
  %321 = vmatpush1.bf16.msra.mxu0 %v259
  %322 = vmatprep.subr.bf16.mxu0 0
  %323 = vmatpush1.bf16.msra.mxu0 %v260
  %324 = vmatprep.subr.bf16.mxu0 0
  %325 = vmatpush1.bf16.msra.mxu0 %v261
  %326 = vmatprep.subr.bf16.mxu0 0
  %327 = vmatpush1.bf16.msra.mxu0 %v262
  %328 = vmatprep.mubr.bf16.mxu0 %v156
  %329 = vmatmul.mubr.bf16.gmra.mrb[0].mxu0 %v155
  %v330 = vpop.f32.mrb[0].mxu0
  %v331 = vadd.f32 %v78, %v330
  %v332 = vpop.f32.mrb[0].mxu0
  %v333 = vpop.f32.mrb[0].mxu0
  %v334 = vadd.f32 %v83, %v333
  %v335 = vpop.f32.mrb[0].mxu0
  %336 = vmatprep.mubr.bf16.mxu0 %v159
  %337 = vmatmul.mubr.bf16.gmra.mrb[0].mxu0 %v158
  %v338 = vpop.f32.mrb[0].mxu0
  %v339 = vadd.f32 %v88, %v338
  %v340 = vpop.f32.mrb[0].mxu0
  %v341 = vpop.f32.mrb[0].mxu0
  %v342 = vadd.f32 %v93, %v341
  %v343 = vpop.f32.mrb[0].mxu0
  %344 = vmatprep.mubr.bf16.mxu0 %v162
  %345 = vmatmul.mubr.bf16.gmra.mrb[0].mxu0 %v161
  %v346 = vpop.f32.mrb[0].mxu0
  %v347 = vadd.f32 %v98, %v346
  %v348 = vpop.f32.mrb[0].mxu0
  %v349 = vpop.f32.mrb[0].mxu0
  %v350 = vadd.f32 %v103, %v349
  %v351 = vpop.f32.mrb[0].mxu0
  %352 = vmatprep.mubr.bf16.mxu0 %v165
  %353 = vmatmul.mubr.bf16.gmra.mrb[0].mxu0 %v164
  %v354 = vpop.f32.mrb[0].mxu0
  %v355 = vadd.f32 %v108, %v354
  %v356 = vpop.f32.mrb[0].mxu0
  %v357 = vpop.f32.mrb[0].mxu0
  %v358 = vadd.f32 %v113, %v357
  %v359 = vpop.f32.mrb[0].mxu0
  %360 = vdwg.mxu0
  %361 = vmatprep.subr.bf16.mxu0 0
  %362 = vmatpush1.bf16.msra.mxu0 %v263
  %363 = vmatprep.subr.bf16.mxu0 0
  %364 = vmatpush1.bf16.msra.mxu0 %v264
  %365 = vmatprep.subr.bf16.mxu0 0
  %366 = vmatpush1.bf16.msra.mxu0 0
  %367 = vmatprep.subr.bf16.mxu0 0
  %368 = vmatpush1.bf16.msra.mxu0 0
  %369 = vmatprep.subr.bf16.mxu0 0
  %370 = vmatpush1.bf16.msra.mxu0 0
  %371 = vmatprep.subr.bf16.mxu0 0
  %372 = vmatpush1.bf16.msra.mxu0 0
  %373 = vmatprep.subr.bf16.mxu0 0
  %374 = vmatpush1.bf16.msra.mxu0 0
  %375 = vmatprep.subr.bf16.mxu0 0
  %376 = vmatpush1.bf16.msra.mxu0 0
  %377 = vmatprep.subr.bf16.mxu0 0
  %378 = vmatpush1.bf16.msra.mxu0 0
  %379 = vmatprep.subr.bf16.mxu0 0
  %380 = vmatpush1.bf16.msra.mxu0 0
  %381 = vmatprep.subr.bf16.mxu0 0
  %382 = vmatpush1.bf16.msra.mxu0 0
  %383 = vmatprep.subr.bf16.mxu0 0
  %384 = vmatpush1.bf16.msra.mxu0 0
  %385 = vmatprep.subr.bf16.mxu0 0
  %386 = vmatpush1.bf16.msra.mxu0 0
  %387 = vmatprep.subr.bf16.mxu0 0
  %388 = vmatpush1.bf16.msra.mxu0 0
  %389 = vmatprep.subr.bf16.mxu0 0
  %390 = vmatpush1.bf16.msra.mxu0 0
  %391 = vmatprep.subr.bf16.mxu0 0
  %392 = vmatpush1.bf16.msra.mxu0 0
  %393 = vmatprep.mubr.bf16.mxu0 0
  %394 = vmatmul.mubr.bf16.gmra.mrb[0].mxu0 %v285
  %v395 = vpop.f32.mrb[0].mxu0
  %v396 = vadd.f32 %v331, %v395
  %v397 = vpop.f32.mrb[0].mxu0
  %v398 = vpop.f32.mrb[0].mxu0
  %v399 = vadd.f32 %v334, %v398
  %v400 = vpop.f32.mrb[0].mxu0
  %401 = vmatprep.mubr.bf16.mxu0 0
  %402 = vmatmul.mubr.bf16.gmra.mrb[0].mxu0 %v288
  %v403 = vpop.f32.mrb[0].mxu0
  %v404 = vadd.f32 %v339, %v403
  %v405 = vpop.f32.mrb[0].mxu0
  %v406 = vpop.f32.mrb[0].mxu0
  %v407 = vadd.f32 %v342, %v406
  %v408 = vpop.f32.mrb[0].mxu0
  %409 = vmatprep.mubr.bf16.mxu0 0
  %410 = vmatmul.mubr.bf16.gmra.mrb[0].mxu0 %v291
  %v411 = vpop.f32.mrb[0].mxu0
  %v412 = vadd.f32 %v347, %v411
  %v413 = vpop.f32.mrb[0].mxu0
  %v414 = vpop.f32.mrb[0].mxu0
  %v415 = vadd.f32 %v350, %v414
  %v416 = vpop.f32.mrb[0].mxu0
  %417 = vmatprep.mubr.bf16.mxu0 0
  %418 = vmatmul.mubr.bf16.gmra.mrb[0].mxu0 %v294
  %v419 = vpop.f32.mrb[0].mxu0
  %v420 = vadd.f32 %v355, %v419
  %v421 = vpop.f32.mrb[0].mxu0
  %v422 = vpop.f32.mrb[0].mxu0
  %v423 = vadd.f32 %v358, %v422
  %v424 = vpop.f32.mrb[0].mxu0
  %425 = vdwg.mxu0
  %v426 = vmax.f32 %v396, 0.0
  %v427 = vmax.f32 %v399, 0.0
  %v428 = vmax.f32 %v404, 0.0
  %v429 = vmax.f32 %v407, 0.0
  %v430 = vmax.f32 %v412, 0.0
  %v431 = vmax.f32 %v415, 0.0
  %v432 = vmax.f32 %v420, 0.0
  %v433 = vmax.f32 %v423, 0.0
  %v434 = vpack.c.bf16 %v427, %v426
  %v435 = vpack.c.bf16 %v429, %v428
  %v436 = vpack.c.bf16 %v431, %v430
  %v437 = vpack.c.bf16 %v433, %v432
  %v442 = vunpack.c.l.b16 %v434
  %v443 = vunpack.c.h.b16 %v434
  %v444 = vunpack.c.l.b16 %v435
  %v445 = vunpack.c.h.b16 %v435
  %v446 = vunpack.c.l.b16 %v436
  %v447 = vunpack.c.h.b16 %v436
  %v448 = vunpack.c.l.b16 %v437
  %v449 = vunpack.c.h.b16 %v437
  %v450 = vpack.c.b16 %v442, %v442
  %v451 = vpack.c.b16 %v443, %v443
  %v452 = vpack.c.b16 %v444, %v444
  %v453 = vpack.c.b16 %v445, %v445
  %v454 = vpack.c.b16 %v446, %v446
  %v455 = vpack.c.b16 %v447, %v447
  %v456 = vpack.c.b16 %v448, %v448
  %v457 = vpack.c.b16 %v449, %v449
  %466 = vst [vmem:[%s3] sm:$0xf] %v450
  %467 = vst [vmem:[%s3 + $0x4] sm:$0xf] %v451
  %468 = vst [vmem:[%s3 + $0x8] sm:$0xf] %v452
  %469 = vst [vmem:[%s3 + $0xc] sm:$0xf] %v453
  %470 = vst [vmem:[%s3 + $0x10] sm:$0xf] %v454
  %471 = vst [vmem:[%s3 + $0x14] sm:$0xf] %v455
  %472 = vst [vmem:[%s3 + $0x18] sm:$0xf] %v456
  %473 = vst [vmem:[%s3 + $0x1c] sm:$0xf] %v457
  // Predicated region
  $region14: #{net6_forward.9} parent=0 // pred_check
    _
  $region15: #{net6_forward.9} parent=0 // pred_check_branch
    %475 = sbr.rel (0) target = $region17
  $region16: #{net6_forward.9} parent=0 // pred_region
    _
  $region17: #{net6_forward.9} parent=0 // pred_fallthru
    _
  // Predicated region
  $region18: #{net6_forward.9} parent=0 // pred_check
    _
  $region19: #{net6_forward.9} parent=0 // pred_check_branch
    %477 = sbr.rel (0) target = $region21
  $region20: #{net6_forward.9} parent=0 // pred_region
    _
  $region21: #{net6_forward.9} parent=0 // pred_fallthru
    _

// kernel: net6_forward.10
$region0: #{net6_forward.10}
  #allocation0 [shape = 'u32[]', space=smem, size = 0x4, offset = 0x4, fixed_abs, tag = 'smem constant byte address 0x4 - core index']
  #allocation1 [shape = 'u32[144,128]{1,0:T(1,128)}', space=vmem, size = 0x12000, scoped, tag = 'internal scratch']
  %s0 = inlined_call_operand.vmem [shape: bf16[32,144], index: 0, kind: input, shape index: {}]
  %s1 = inlined_call_operand.vmem [shape: f32[32,1], index: 1, kind: input, shape index: {}]
  %s2 = inlined_call_operand.vmem [shape: bf16[144,32], index: 2, kind: input, shape index: {}]
  %s3 = inlined_call_operand.vmem [shape: bf16[32,32], index: 3, kind: output, shape index: {}]
  %s4 = sld [smem:[#allocation0]]
  $region22: #{net6_forward.10} parent=0
    _
  %s6 = ssub.s32 1, %s4
  %s7 = scalar_select 0, %s6, %s4
  // Predicated region
  $region2: #{net6_forward.10} parent=0 // pred_check
    _
  $region3: #{net6_forward.10} parent=0 // pred_check_branch
    %9 = sbr.rel (0) target = $region5
  $region4: #{net6_forward.10} parent=0 // pred_region
    _
  $region5: #{net6_forward.10} parent=0 // pred_fallthru
    _
  // Predicated region
  $region6: #{net6_forward.10} parent=0 // pred_check
    _
  $region7: #{net6_forward.10} parent=0 // pred_check_branch
    %11 = sbr.rel (0) target = $region9
  $region8: #{net6_forward.10} parent=0 // pred_region
    _
  $region9: #{net6_forward.10} parent=0 // pred_fallthru
    _
  // Predicated region
  $region10: #{net6_forward.10} parent=0 // pred_check
    _
  $region11: #{net6_forward.10} parent=0 // pred_check_branch
    %13 = sbr.rel (0) target = $region13
  $region12: #{net6_forward.10} parent=0 // pred_region
    _
  $region13: #{net6_forward.10} parent=0 // pred_fallthru
    _
  %v15 = vld [vmem:[%s0] sm:$0xff]
  %v16 = vld [vmem:[%s0 + $0x8] sm:$0xff]
  %v17 = vld [vmem:[%s0 + $0x10] sm:$0xff]
  %v18 = vld [vmem:[%s0 + $0x18] sm:$0xff]
  %v19 = vld [vmem:[%s2] sm:$0xf]
  %v20 = vld [vmem:[%s2 + $0x4] sm:$0xf]
  %v21 = vld [vmem:[%s2 + $0x8] sm:$0xf]
  %v22 = vld [vmem:[%s2 + $0xc] sm:$0xf]
  %v23 = vld [vmem:[%s2 + $0x10] sm:$0xf]
  %v24 = vld [vmem:[%s2 + $0x14] sm:$0xf]
  %v25 = vld [vmem:[%s2 + $0x18] sm:$0xf]
  %v26 = vld [vmem:[%s2 + $0x1c] sm:$0xf]
  %v27 = vld [vmem:[%s2 + $0x20] sm:$0xf]
  %v28 = vld [vmem:[%s2 + $0x24] sm:$0xf]
  %v29 = vld [vmem:[%s2 + $0x28] sm:$0xf]
  %v30 = vld [vmem:[%s2 + $0x2c] sm:$0xf]
  %v31 = vld [vmem:[%s2 + $0x30] sm:$0xf]
  %v32 = vld [vmem:[%s2 + $0x34] sm:$0xf]
  %v33 = vld [vmem:[%s2 + $0x38] sm:$0xf]
  %v34 = vld [vmem:[%s2 + $0x3c] sm:$0xf]
  %v35 = vld [vmem:[%s2 + $0x40] sm:$0xf]
  %v36 = vld [vmem:[%s2 + $0x44] sm:$0xf]
  %v37 = vld [vmem:[%s1] sm:$0xff]
  %v38 = vld [vmem:[%s1 + $0x8] sm:$0xff]
  %v39 = vld [vmem:[%s1 + $0x10] sm:$0xff]
  %v40 = vld [vmem:[%s1 + $0x18] sm:$0xff]
  %42 = vset.pattern.permute.xlu0 0
  %43 = vperm.xlu0 %42, %v37
  %v44 = vpop.permute.xlu0 %43
  %47 = vset.pattern.permute.xlu0 0
  %48 = vperm.xlu0 %47, %v38
  %v49 = vpop.permute.xlu0 %48
  %52 = vset.pattern.permute.xlu0 0
  %53 = vperm.xlu0 %52, %v39
  %v54 = vpop.permute.xlu0 %53
  %57 = vset.pattern.permute.xlu0 0
  %58 = vperm.xlu0 %57, %v40
  %v59 = vpop.permute.xlu0 %58
  %v65 = vunpack.c.l.b16 %v15
  %v66 = vunpack.c.h.b16 %v15
  %v67 = vunpack.c.l.b16 %v16
  %v68 = vunpack.c.h.b16 %v16
  %v69 = vunpack.c.l.b16 %v17
  %v70 = vunpack.c.h.b16 %v17
  %v71 = vunpack.c.l.b16 %v18
  %v72 = vunpack.c.h.b16 %v18
  %v73 = vpack.c.b16 %v67, %v65
  %v74 = vpack.c.b16 %v68, %v66
  %v75 = vpack.c.b16 %v71, %v69
  %v76 = vpack.c.b16 %v72, %v70
  %v97 = vunpack.c.l.b16 %v19
  %v98 = vunpack.c.l.b16 %v20
  %v99 = vunpack.c.l.b16 %v21
  %v100 = vunpack.c.l.b16 %v22
  %v101 = vunpack.c.l.b16 %v23
  %v102 = vunpack.c.l.b16 %v24
  %v103 = vunpack.c.l.b16 %v25
  %v104 = vunpack.c.l.b16 %v26
  %v105 = vunpack.c.l.b16 %v27
  %v106 = vunpack.c.l.b16 %v28
  %v107 = vunpack.c.l.b16 %v29
  %v108 = vunpack.c.l.b16 %v30
  %v109 = vunpack.c.l.b16 %v31
  %v110 = vunpack.c.l.b16 %v32
  %v111 = vunpack.c.l.b16 %v33
  %v112 = vunpack.c.l.b16 %v34
  %v113 = vunpack.c.l.b16 %v35
  %v114 = vunpack.c.l.b16 %v36
  %v115 = vpack.c.b16 %v98, %v97
  %v116 = vpack.c.b16 %v100, %v99
  %v117 = vpack.c.b16 %v102, %v101
  %v118 = vpack.c.b16 %v104, %v103
  %v119 = vpack.c.b16 %v106, %v105
  %v120 = vpack.c.b16 %v108, %v107
  %v121 = vpack.c.b16 %v110, %v109
  %v122 = vpack.c.b16 %v112, %v111
  %v123 = vpack.c.b16 %v114, %v113
  %vm133 = vcmask 130048
  %v135 = vsel %vm133, %v74, 0
  %v138 = vsel %vm133, %v76, 0
  %140 = vmatprep.subr.bf16.mxu0 0
  %141 = vmatpush1.bf16.msra.mxu0 %v115
  %142 = vmatprep.subr.bf16.mxu0 0
  %143 = vmatpush1.bf16.msra.mxu0 %v116
  %144 = vmatprep.subr.bf16.mxu0 0
  %145 = vmatpush1.bf16.msra.mxu0 %v117
  %146 = vmatprep.subr.bf16.mxu0 0
  %147 = vmatpush1.bf16.msra.mxu0 %v118
  %148 = vmatprep.subr.bf16.mxu0 0
  %149 = vmatpush1.bf16.msra.mxu0 %v119
  %150 = vmatprep.subr.bf16.mxu0 0
  %151 = vmatpush1.bf16.msra.mxu0 %v120
  %152 = vmatprep.subr.bf16.mxu0 0
  %153 = vmatpush1.bf16.msra.mxu0 %v121
  %154 = vmatprep.subr.bf16.mxu0 0
  %155 = vmatpush1.bf16.msra.mxu0 %v122
  %156 = vmatprep.subr.bf16.mxu0 0
  %157 = vmatpush1.bf16.msra.mxu0 %v123
  %158 = vmatprep.subr.bf16.mxu0 0
  %159 = vmatpush1.bf16.msra.mxu0 0
  %160 = vmatprep.subr.bf16.mxu0 0
  %161 = vmatpush1.bf16.msra.mxu0 0
  %162 = vmatprep.subr.bf16.mxu0 0
  %163 = vmatpush1.bf16.msra.mxu0 0
  %164 = vmatprep.subr.bf16.mxu0 0
  %165 = vmatpush1.bf16.msra.mxu0 0
  %166 = vmatprep.subr.bf16.mxu0 0
  %167 = vmatpush1.bf16.msra.mxu0 0
  %168 = vmatprep.subr.bf16.mxu0 0
  %169 = vmatpush1.bf16.msra.mxu0 0
  %170 = vmatprep.subr.bf16.mxu0 0
  %171 = vmatpush1.bf16.msra.mxu0 0
  %172 = vmatprep.mubr.bf16.mxu0 %v135
  %173 = vmatmul.mubr.bf16.gmra.mrb[0].mxu0 %v73
  %v174 = vpop.f32.mrb[0].mxu0
  %v175 = vadd.f32 %v44, %v174
  %v176 = vpop.f32.mrb[0].mxu0
  %v177 = vpop.f32.mrb[0].mxu0
  %v178 = vadd.f32 %v49, %v177
  %v179 = vpop.f32.mrb[0].mxu0
  %180 = vmatprep.mubr.bf16.mxu0 %v138
  %181 = vmatmul.mubr.bf16.gmra.mrb[0].mxu0 %v75
  %v182 = vpop.f32.mrb[0].mxu0
  %v183 = vadd.f32 %v54, %v182
  %v184 = vpop.f32.mrb[0].mxu0
  %v185 = vpop.f32.mrb[0].mxu0
  %v186 = vadd.f32 %v59, %v185
  %v187 = vpop.f32.mrb[0].mxu0
  %188 = vdwg.mxu0
  %v189 = vmax.f32 %v175, 0.0
  %v190 = vmax.f32 %v178, 0.0
  %v191 = vmax.f32 %v183, 0.0
  %v192 = vmax.f32 %v186, 0.0
  %v193 = vpack.c.bf16 %v190, %v189
  %v194 = vpack.c.bf16 %v192, %v191
  %v197 = vunpack.c.l.b16 %v193
  %v198 = vunpack.c.h.b16 %v193
  %v199 = vunpack.c.l.b16 %v194
  %v200 = vunpack.c.h.b16 %v194
  %v201 = vpack.c.b16 %v197, %v197
  %v202 = vpack.c.b16 %v198, %v198
  %v203 = vpack.c.b16 %v199, %v199
  %v204 = vpack.c.b16 %v200, %v200
  %209 = vst [vmem:[%s3] sm:$0xf] %v201
  %210 = vst [vmem:[%s3 + $0x4] sm:$0xf] %v202
  %211 = vst [vmem:[%s3 + $0x8] sm:$0xf] %v203
  %212 = vst [vmem:[%s3 + $0xc] sm:$0xf] %v204
  // Predicated region
  $region14: #{net6_forward.10} parent=0 // pred_check
    _
  $region15: #{net6_forward.10} parent=0 // pred_check_branch
    %214 = sbr.rel (0) target = $region17
  $region16: #{net6_forward.10} parent=0 // pred_region
    _
  $region17: #{net6_forward.10} parent=0 // pred_fallthru
    _
  // Predicated region
  $region18: #{net6_forward.10} parent=0 // pred_check
    _
  $region19: #{net6_forward.10} parent=0 // pred_check_branch
    %216 = sbr.rel (0) target = $region21
  $region20: #{net6_forward.10} parent=0 // pred_region
    _
  $region21: #{net6_forward.10} parent=0 // pred_fallthru
    _

// kernel: net6_forward.11
$region0: #{net6_forward.11}
  #allocation0 [shape = 'u32[]', space=smem, size = 0x4, offset = 0x4, fixed_abs, tag = 'smem constant byte address 0x4 - core index']
  #allocation1 [shape = 'u32[144,128]{1,0:T(1,128)}', space=vmem, size = 0x12000, scoped, tag = 'internal scratch']
  %s0 = inlined_call_operand.vmem [shape: bf16[8,80], index: 0, kind: input, shape index: {}]
  %s1 = inlined_call_operand.vmem [shape: f32[8,1], index: 1, kind: input, shape index: {}]
  %s2 = inlined_call_operand.vmem [shape: bf16[80,128], index: 2, kind: input, shape index: {}]
  %s3 = inlined_call_operand.vmem [shape: f32[8,128], index: 3, kind: output, shape index: {}]
  %s4 = sld [smem:[#allocation0]]
  $region22: #{net6_forward.11} parent=0
    _
  %s6 = ssub.s32 1, %s4
  %s7 = scalar_select 0, %s6, %s4
  // Predicated region
  $region2: #{net6_forward.11} parent=0 // pred_check
    _
  $region3: #{net6_forward.11} parent=0 // pred_check_branch
    %9 = sbr.rel (0) target = $region5
  $region4: #{net6_forward.11} parent=0 // pred_region
    _
  $region5: #{net6_forward.11} parent=0 // pred_fallthru
    _
  // Predicated region
  $region6: #{net6_forward.11} parent=0 // pred_check
    _
  $region7: #{net6_forward.11} parent=0 // pred_check_branch
    %11 = sbr.rel (0) target = $region9
  $region8: #{net6_forward.11} parent=0 // pred_region
    _
  $region9: #{net6_forward.11} parent=0 // pred_fallthru
    _
  // Predicated region
  $region10: #{net6_forward.11} parent=0 // pred_check
    _
  $region11: #{net6_forward.11} parent=0 // pred_check_branch
    %13 = sbr.rel (0) target = $region13
  $region12: #{net6_forward.11} parent=0 // pred_region
    _
  $region13: #{net6_forward.11} parent=0 // pred_fallthru
    _
  %v15 = vld [vmem:[%s0] sm:$0xf]
  %v16 = vld [vmem:[%s2] sm:$0xf]
  %v17 = vld [vmem:[%s2 + $0x4] sm:$0xf]
  %v18 = vld [vmem:[%s2 + $0x8] sm:$0xf]
  %v19 = vld [vmem:[%s2 + $0xc] sm:$0xf]
  %v20 = vld [vmem:[%s2 + $0x10] sm:$0xf]
  %v21 = vld [vmem:[%s2 + $0x14] sm:$0xf]
  %v22 = vld [vmem:[%s2 + $0x18] sm:$0xf]
  %v23 = vld [vmem:[%s2 + $0x1c] sm:$0xf]
  %v24 = vld [vmem:[%s2 + $0x20] sm:$0xf]
  %v25 = vld [vmem:[%s2 + $0x24] sm:$0xf]
  %v26 = vld [vmem:[%s1] sm:$0xff]
  %28 = vset.pattern.permute.xlu0 0
  %29 = vperm.xlu0 %28, %v26
  %v30 = vpop.permute.xlu0 %29
  %v42 = vunpack.c.l.b16 %v16
  %v43 = vunpack.c.l.b16 %v17
  %v44 = vunpack.c.l.b16 %v18
  %v45 = vunpack.c.l.b16 %v19
  %v46 = vunpack.c.l.b16 %v20
  %v47 = vunpack.c.l.b16 %v21
  %v48 = vunpack.c.l.b16 %v22
  %v49 = vunpack.c.l.b16 %v23
  %v50 = vunpack.c.l.b16 %v24
  %v51 = vunpack.c.l.b16 %v25
  %v52 = vpack.c.b16 %v43, %v42
  %v53 = vpack.c.b16 %v45, %v44
  %v54 = vpack.c.b16 %v47, %v46
  %v55 = vpack.c.b16 %v49, %v48
  %v56 = vpack.c.b16 %v51, %v50
  %vm62 = vcmask 654336
  %v64 = vsel %vm62, %v15, 0
  %66 = vmatprep.subr.bf16.mxu0 0
  %67 = vmatpush1.bf16.msra.mxu0 %v52
  %68 = vmatprep.subr.bf16.mxu0 0
  %69 = vmatpush1.bf16.msra.mxu0 %v53
  %70 = vmatprep.subr.bf16.mxu0 0
  %71 = vmatpush1.bf16.msra.mxu0 %v54
  %72 = vmatprep.subr.bf16.mxu0 0
  %73 = vmatpush1.bf16.msra.mxu0 %v55
  %74 = vmatprep.subr.bf16.mxu0 0
  %75 = vmatpush1.bf16.msra.mxu0 %v56
  %76 = vmatprep.subr.bf16.mxu0 0
  %77 = vmatpush1.bf16.msra.mxu0 0
  %78 = vmatprep.subr.bf16.mxu0 0
  %79 = vmatpush1.bf16.msra.mxu0 0
  %80 = vmatprep.subr.bf16.mxu0 0
  %81 = vmatpush1.bf16.msra.mxu0 0
  %82 = vmatprep.subr.bf16.mxu0 0
  %83 = vmatpush1.bf16.msra.mxu0 0
  %84 = vmatprep.subr.bf16.mxu0 0
  %85 = vmatpush1.bf16.msra.mxu0 0
  %86 = vmatprep.subr.bf16.mxu0 0
  %87 = vmatpush1.bf16.msra.mxu0 0
  %88 = vmatprep.subr.bf16.mxu0 0
  %89 = vmatpush1.bf16.msra.mxu0 0
  %90 = vmatprep.subr.bf16.mxu0 0
  %91 = vmatpush1.bf16.msra.mxu0 0
  %92 = vmatprep.subr.bf16.mxu0 0
  %93 = vmatpush1.bf16.msra.mxu0 0
  %94 = vmatprep.subr.bf16.mxu0 0
  %95 = vmatpush1.bf16.msra.mxu0 0
  %96 = vmatprep.subr.bf16.mxu0 0
  %97 = vmatpush1.bf16.msra.mxu0 0
  %98 = vmatprep.mubr.bf16.mxu0 0
  %99 = vmatmul.mubr.bf16.gmra.mrb[0].mxu0 %v64
  %v100 = vpop.f32.mrb[0].mxu0
  %v101 = vadd.f32 %v30, %v100
  %v102 = vpop.f32.mrb[0].mxu0
  %v103 = vpop.f32.mrb[0].mxu0
  %v104 = vpop.f32.mrb[0].mxu0
  %105 = vdwg.mxu0
  %106 = vst [vmem:[%s3] sm:$0xff] %v101
  // Predicated region
  $region14: #{net6_forward.11} parent=0 // pred_check
    _
  $region15: #{net6_forward.11} parent=0 // pred_check_branch
    %108 = sbr.rel (0) target = $region17
  $region16: #{net6_forward.11} parent=0 // pred_region
    _
  $region17: #{net6_forward.11} parent=0 // pred_fallthru
    _
  // Predicated region
  $region18: #{net6_forward.11} parent=0 // pred_check
    _
  $region19: #{net6_forward.11} parent=0 // pred_check_branch
    %110 = sbr.rel (0) target = $region21
  $region20: #{net6_forward.11} parent=0 // pred_region
    _
  $region21: #{net6_forward.11} parent=0 // pred_fallthru
    _

// kernel: squeeze.6
$region0: #{squeeze.6}
  %s0 = inlined_call_operand.vmem [shape: f32[1,2,8,2,8,2], index: 0, kind: input, shape index: {}]
  %s1 = inlined_call_operand.vmem [shape: f32[2,16,16], index: 1, kind: output, shape index: {}]
  %v2 = vld [vmem:[%s0] ss:$8 sm:$0xf]
  %v3 = vld [vmem:[%s0] ss:$8 sm:$0xf0]
  %vm4 = vcmask 1047556
  %v5 = vsel %vm4, %v3, %v2
  %vm6 = vcmask 15360
  %7 = vst.msk [vmem:[%s1] sm:$0xff] %vm6, %v5
  %s8 = scalar_lea.vmem %s0, 64
  %v9 = vld [vmem:[%s8] ss:$8 sm:$0xf]
  %s10 = scalar_lea.vmem %s0, 64
  %v11 = vld [vmem:[%s10] ss:$8 sm:$0xf0]
  %vm12 = vcmask 1047556
  %v13 = vsel %vm12, %v11, %v9
  %vm14 = vcmask 15360
  %s15 = scalar_lea.vmem %s1, 8
  %16 = vst.msk [vmem:[%s15] sm:$0xff] %vm14, %v13
  %s17 = scalar_lea.vmem %s0, 128
  %v18 = vld [vmem:[%s17] ss:$8 sm:$0xf]
  %s19 = scalar_lea.vmem %s0, 128
  %v20 = vld [vmem:[%s19] ss:$8 sm:$0xf0]
  %vm21 = vcmask 1047556
  %v22 = vsel %vm21, %v20, %v18
  %vm23 = vcmask 15360
  %s24 = scalar_lea.vmem %s1, 16
  %25 = vst.msk [vmem:[%s24] sm:$0xff] %vm23, %v22
  %s26 = scalar_lea.vmem %s0, 192
  %v27 = vld [vmem:[%s26] ss:$8 sm:$0xf]
  %s28 = scalar_lea.vmem %s0, 192
  %v29 = vld [vmem:[%s28] ss:$8 sm:$0xf0]
  %vm30 = vcmask 1047556
  %v31 = vsel %vm30, %v29, %v27
  %vm32 = vcmask 15360
  %s33 = scalar_lea.vmem %s1, 24
  %34 = vst.msk [vmem:[%s33] sm:$0xff] %vm32, %v31
  %s35 = scalar_lea.vmem %s0, 7
  %v36 = vld [vmem:[%s35] ss:$8 sm:$0xf]
  %s37 = scalar_lea.vmem %s0, 7
  %v38 = vld [vmem:[%s37] ss:$8 sm:$0xf0]
  %vm39 = vcmask 1047556
  %v40 = vsel %vm39, %v38, %v36
  %41 = vrot.lane.b32.xlu0 %v40, 14
  %v42 = vpop.permute.xlu0 %41
  %vm43 = vcmask 130160
  %44 = vst.msk [vmem:[%s1] sm:$0xff] %vm43, %v42
  %s45 = scalar_lea.vmem %s0, 71
  %v46 = vld [vmem:[%s45] ss:$8 sm:$0xf]
  %s47 = scalar_lea.vmem %s0, 71
  %v48 = vld [vmem:[%s47] ss:$8 sm:$0xf0]
  %vm49 = vcmask 1047556
  %v50 = vsel %vm49, %v48, %v46
  %51 = vrot.lane.b32.xlu0 %v50, 14
  %v52 = vpop.permute.xlu0 %51
  %vm53 = vcmask 130160
  %s54 = scalar_lea.vmem %s1, 8
  %55 = vst.msk [vmem:[%s54] sm:$0xff] %vm53, %v52
  %s56 = scalar_lea.vmem %s0, 135
  %v57 = vld [vmem:[%s56] ss:$8 sm:$0xf]
  %s58 = scalar_lea.vmem %s0, 135
  %v59 = vld [vmem:[%s58] ss:$8 sm:$0xf0]
  %vm60 = vcmask 1047556
  %v61 = vsel %vm60, %v59, %v57
  %62 = vrot.lane.b32.xlu0 %v61, 14
  %v63 = vpop.permute.xlu0 %62
  %vm64 = vcmask 130160
  %s65 = scalar_lea.vmem %s1, 16
  %66 = vst.msk [vmem:[%s65] sm:$0xff] %vm64, %v63
  %s67 = scalar_lea.vmem %s0, 199
  %v68 = vld [vmem:[%s67] ss:$8 sm:$0xf]
  %s69 = scalar_lea.vmem %s0, 199
  %v70 = vld [vmem:[%s69] ss:$8 sm:$0xf0]
  %vm71 = vcmask 1047556
  %v72 = vsel %vm71, %v70, %v68
  %73 = vrot.lane.b32.xlu0 %v72, 14
  %v74 = vpop.permute.xlu0 %73
  %vm75 = vcmask 130160
  %s76 = scalar_lea.vmem %s1, 24
  %77 = vst.msk [vmem:[%s76] sm:$0xff] %vm75, %v74
  %s78 = scalar_lea.vmem %s0, 6
  %v79 = vld [vmem:[%s78] ss:$8 sm:$0xf]
  %s80 = scalar_lea.vmem %s0, 6
  %v81 = vld [vmem:[%s80] ss:$8 sm:$0xf0]
  %vm82 = vcmask 1047556
  %v83 = vsel %vm82, %v81, %v79
  %84 = vrot.lane.b32.xlu0 %v83, 12
  %v85 = vpop.permute.xlu0 %84
  %vm86 = vcmask 113760
  %87 = vst.msk [vmem:[%s1] sm:$0xff] %vm86, %v85
  %s88 = scalar_lea.vmem %s0, 70
  %v89 = vld [vmem:[%s88] ss:$8 sm:$0xf]
  %s90 = scalar_lea.vmem %s0, 70
  %v91 = vld [vmem:[%s90] ss:$8 sm:$0xf0]
  %vm92 = vcmask 1047556
  %v93 = vsel %vm92, %v91, %v89
  %94 = vrot.lane.b32.xlu0 %v93, 12
  %v95 = vpop.permute.xlu0 %94
  %vm96 = vcmask 113760
  %s97 = scalar_lea.vmem %s1, 8
  %98 = vst.msk [vmem:[%s97] sm:$0xff] %vm96, %v95
  %s99 = scalar_lea.vmem %s0, 134
  %v100 = vld [vmem:[%s99] ss:$8 sm:$0xf]
  %s101 = scalar_lea.vmem %s0, 134
  %v102 = vld [vmem:[%s101] ss:$8 sm:$0xf0]
  %vm103 = vcmask 1047556
  %v104 = vsel %vm103, %v102, %v100
  %105 = vrot.lane.b32.xlu0 %v104, 12
  %v106 = vpop.permute.xlu0 %105
  %vm107 = vcmask 113760
  %s108 = scalar_lea.vmem %s1, 16
  %109 = vst.msk [vmem:[%s108] sm:$0xff] %vm107, %v106
  %s110 = scalar_lea.vmem %s0, 198
  %v111 = vld [vmem:[%s110] ss:$8 sm:$0xf]
  %s112 = scalar_lea.vmem %s0, 198
  %v113 = vld [vmem:[%s112] ss:$8 sm:$0xf0]
  %vm114 = vcmask 1047556
  %v115 = vsel %vm114, %v113, %v111
  %116 = vrot.lane.b32.xlu0 %v115, 12
  %v117 = vpop.permute.xlu0 %116
  %vm118 = vcmask 113760
  %s119 = scalar_lea.vmem %s1, 24
  %120 = vst.msk [vmem:[%s119] sm:$0xff] %vm118, %v117
  %s121 = scalar_lea.vmem %s0, 5
  %v122 = vld [vmem:[%s121] ss:$8 sm:$0xf]
  %s123 = scalar_lea.vmem %s0, 5
  %v124 = vld [vmem:[%s123] ss:$8 sm:$0xf0]
  %vm125 = vcmask 1047556
  %v126 = vsel %vm125, %v124, %v122
  %127 = vrot.lane.b32.xlu0 %v126, 10
  %v128 = vpop.permute.xlu0 %127
  %vm129 = vcmask 97360
  %130 = vst.msk [vmem:[%s1] sm:$0xff] %vm129, %v128
  %s131 = scalar_lea.vmem %s0, 69
  %v132 = vld [vmem:[%s131] ss:$8 sm:$0xf]
  %s133 = scalar_lea.vmem %s0, 69
  %v134 = vld [vmem:[%s133] ss:$8 sm:$0xf0]
  %vm135 = vcmask 1047556
  %v136 = vsel %vm135, %v134, %v132
  %137 = vrot.lane.b32.xlu0 %v136, 10
  %v138 = vpop.permute.xlu0 %137
  %vm139 = vcmask 97360
  %s140 = scalar_lea.vmem %s1, 8
  %141 = vst.msk [vmem:[%s140] sm:$0xff] %vm139, %v138
  %s142 = scalar_lea.vmem %s0, 133
  %v143 = vld [vmem:[%s142] ss:$8 sm:$0xf]
  %s144 = scalar_lea.vmem %s0, 133
  %v145 = vld [vmem:[%s144] ss:$8 sm:$0xf0]
  %vm146 = vcmask 1047556
  %v147 = vsel %vm146, %v145, %v143
  %148 = vrot.lane.b32.xlu0 %v147, 10
  %v149 = vpop.permute.xlu0 %148
  %vm150 = vcmask 97360
  %s151 = scalar_lea.vmem %s1, 16
  %152 = vst.msk [vmem:[%s151] sm:$0xff] %vm150, %v149
  %s153 = scalar_lea.vmem %s0, 197
  %v154 = vld [vmem:[%s153] ss:$8 sm:$0xf]
  %s155 = scalar_lea.vmem %s0, 197
  %v156 = vld [vmem:[%s155] ss:$8 sm:$0xf0]
  %vm157 = vcmask 1047556
  %v158 = vsel %vm157, %v156, %v154
  %159 = vrot.lane.b32.xlu0 %v158, 10
  %v160 = vpop.permute.xlu0 %159
  %vm161 = vcmask 97360
  %s162 = scalar_lea.vmem %s1, 24
  %163 = vst.msk [vmem:[%s162] sm:$0xff] %vm161, %v160
  %s164 = scalar_lea.vmem %s0, 4
  %v165 = vld [vmem:[%s164] ss:$8 sm:$0xf]
  %s166 = scalar_lea.vmem %s0, 4
  %v167 = vld [vmem:[%s166] ss:$8 sm:$0xf0]
  %vm168 = vcmask 1047556
  %v169 = vsel %vm168, %v167, %v165
  %170 = vrot.lane.b32.xlu0 %v169, 8
  %v171 = vpop.permute.xlu0 %170
  %vm172 = vcmask 80960
  %173 = vst.msk [vmem:[%s1] sm:$0xff] %vm172, %v171
  %s174 = scalar_lea.vmem %s0, 68
  %v175 = vld [vmem:[%s174] ss:$8 sm:$0xf]
  %s176 = scalar_lea.vmem %s0, 68
  %v177 = vld [vmem:[%s176] ss:$8 sm:$0xf0]
  %vm178 = vcmask 1047556
  %v179 = vsel %vm178, %v177, %v175
  %180 = vrot.lane.b32.xlu0 %v179, 8
  %v181 = vpop.permute.xlu0 %180
  %vm182 = vcmask 80960
  %s183 = scalar_lea.vmem %s1, 8
  %184 = vst.msk [vmem:[%s183] sm:$0xff] %vm182, %v181
  %s185 = scalar_lea.vmem %s0, 132
  %v186 = vld [vmem:[%s185] ss:$8 sm:$0xf]
  %s187 = scalar_lea.vmem %s0, 132
  %v188 = vld [vmem:[%s187] ss:$8 sm:$0xf0]
  %vm189 = vcmask 1047556
  %v190 = vsel %vm189, %v188, %v186
  %191 = vrot.lane.b32.xlu0 %v190, 8
  %v192 = vpop.permute.xlu0 %191
  %vm193 = vcmask 80960
  %s194 = scalar_lea.vmem %s1, 16
  %195 = vst.msk [vmem:[%s194] sm:$0xff] %vm193, %v192
  %s196 = scalar_lea.vmem %s0, 196
  %v197 = vld [vmem:[%s196] ss:$8 sm:$0xf]
  %s198 = scalar_lea.vmem %s0, 196
  %v199 = vld [vmem:[%s198] ss:$8 sm:$0xf0]
  %vm200 = vcmask 1047556
  %v201 = vsel %vm200, %v199, %v197
  %202 = vrot.lane.b32.xlu0 %v201, 8
  %v203 = vpop.permute.xlu0 %202
  %vm204 = vcmask 80960
  %s205 = scalar_lea.vmem %s1, 24
  %206 = vst.msk [vmem:[%s205] sm:$0xff] %vm204, %v203
  %s207 = scalar_lea.vmem %s0, 3
  %v208 = vld [vmem:[%s207] ss:$8 sm:$0xf]
  %s209 = scalar_lea.vmem %s0, 3
  %v210 = vld [vmem:[%s209] ss:$8 sm:$0xf0]
  %vm211 = vcmask 1047556
  %v212 = vsel %vm211, %v210, %v208
  %213 = vrot.lane.b32.xlu0 %v212, 6
  %v214 = vpop.permute.xlu0 %213
  %vm215 = vcmask 64560
  %216 = vst.msk [vmem:[%s1] sm:$0xff] %vm215, %v214
  %s217 = scalar_lea.vmem %s0, 67
  %v218 = vld [vmem:[%s217] ss:$8 sm:$0xf]
  %s219 = scalar_lea.vmem %s0, 67
  %v220 = vld [vmem:[%s219] ss:$8 sm:$0xf0]
  %vm221 = vcmask 1047556
  %v222 = vsel %vm221, %v220, %v218
  %223 = vrot.lane.b32.xlu0 %v222, 6
  %v224 = vpop.permute.xlu0 %223
  %vm225 = vcmask 64560
  %s226 = scalar_lea.vmem %s1, 8
  %227 = vst.msk [vmem:[%s226] sm:$0xff] %vm225, %v224
  %s228 = scalar_lea.vmem %s0, 131
  %v229 = vld [vmem:[%s228] ss:$8 sm:$0xf]
  %s230 = scalar_lea.vmem %s0, 131
  %v231 = vld [vmem:[%s230] ss:$8 sm:$0xf0]
  %vm232 = vcmask 1047556
  %v233 = vsel %vm232, %v231, %v229
  %234 = vrot.lane.b32.xlu0 %v233, 6
  %v235 = vpop.permute.xlu0 %234
  %vm236 = vcmask 64560
  %s237 = scalar_lea.vmem %s1, 16
  %238 = vst.msk [vmem:[%s237] sm:$0xff] %vm236, %v235
  %s239 = scalar_lea.vmem %s0, 195
  %v240 = vld [vmem:[%s239] ss:$8 sm:$0xf]
  %s241 = scalar_lea.vmem %s0, 195
  %v242 = vld [vmem:[%s241] ss:$8 sm:$0xf0]
  %vm243 = vcmask 1047556
  %v244 = vsel %vm243, %v242, %v240
  %245 = vrot.lane.b32.xlu0 %v244, 6
  %v246 = vpop.permute.xlu0 %245
  %vm247 = vcmask 64560
  %s248 = scalar_lea.vmem %s1, 24
  %249 = vst.msk [vmem:[%s248] sm:$0xff] %vm247, %v246
  %s250 = scalar_lea.vmem %s0, 2
  %v251 = vld [vmem:[%s250] ss:$8 sm:$0xf]
  %s252 = scalar_lea.vmem %s0, 2
  %v253 = vld [vmem:[%s252] ss:$8 sm:$0xf0]
  %vm254 = vcmask 1047556
  %v255 = vsel %vm254, %v253, %v251
  %256 = vrot.lane.b32.xlu0 %v255, 4
  %v257 = vpop.permute.xlu0 %256
  %vm258 = vcmask 48160
  %259 = vst.msk [vmem:[%s1] sm:$0xff] %vm258, %v257
  %s260 = scalar_lea.vmem %s0, 66
  %v261 = vld [vmem:[%s260] ss:$8 sm:$0xf]
  %s262 = scalar_lea.vmem %s0, 66
  %v263 = vld [vmem:[%s262] ss:$8 sm:$0xf0]
  %vm264 = vcmask 1047556
  %v265 = vsel %vm264, %v263, %v261
  %266 = vrot.lane.b32.xlu0 %v265, 4
  %v267 = vpop.permute.xlu0 %266
  %vm268 = vcmask 48160
  %s269 = scalar_lea.vmem %s1, 8
  %270 = vst.msk [vmem:[%s269] sm:$0xff] %vm268, %v267
  %s271 = scalar_lea.vmem %s0, 130
  %v272 = vld [vmem:[%s271] ss:$8 sm:$0xf]
  %s273 = scalar_lea.vmem %s0, 130
  %v274 = vld [vmem:[%s273] ss:$8 sm:$0xf0]
  %vm275 = vcmask 1047556
  %v276 = vsel %vm275, %v274, %v272
  %277 = vrot.lane.b32.xlu0 %v276, 4
  %v278 = vpop.permute.xlu0 %277
  %vm279 = vcmask 48160
  %s280 = scalar_lea.vmem %s1, 16
  %281 = vst.msk [vmem:[%s280] sm:$0xff] %vm279, %v278
  %s282 = scalar_lea.vmem %s0, 194
  %v283 = vld [vmem:[%s282] ss:$8 sm:$0xf]
  %s284 = scalar_lea.vmem %s0, 194
  %v285 = vld [vmem:[%s284] ss:$8 sm:$0xf0]
  %vm286 = vcmask 1047556
  %v287 = vsel %vm286, %v285, %v283
  %288 = vrot.lane.b32.xlu0 %v287, 4
  %v289 = vpop.permute.xlu0 %288
  %vm290 = vcmask 48160
  %s291 = scalar_lea.vmem %s1, 24
  %292 = vst.msk [vmem:[%s291] sm:$0xff] %vm290, %v289
  %s293 = scalar_lea.vmem %s0, 1
  %v294 = vld [vmem:[%s293] ss:$8 sm:$0xf]
  %s295 = scalar_lea.vmem %s0, 1
  %v296 = vld [vmem:[%s295] ss:$8 sm:$0xf0]
  %vm297 = vcmask 1047556
  %v298 = vsel %vm297, %v296, %v294
  %299 = vrot.lane.b32.xlu0 %v298, 2
  %v300 = vpop.permute.xlu0 %299
  %vm301 = vcmask 31760
  %302 = vst.msk [vmem:[%s1] sm:$0xff] %vm301, %v300
  %s303 = scalar_lea.vmem %s0, 65
  %v304 = vld [vmem:[%s303] ss:$8 sm:$0xf]
  %s305 = scalar_lea.vmem %s0, 65
  %v306 = vld [vmem:[%s305] ss:$8 sm:$0xf0]
  %vm307 = vcmask 1047556
  %v308 = vsel %vm307, %v306, %v304
  %309 = vrot.lane.b32.xlu0 %v308, 2
  %v310 = vpop.permute.xlu0 %309
  %vm311 = vcmask 31760
  %s312 = scalar_lea.vmem %s1, 8
  %313 = vst.msk [vmem:[%s312] sm:$0xff] %vm311, %v310
  %s314 = scalar_lea.vmem %s0, 129
  %v315 = vld [vmem:[%s314] ss:$8 sm:$0xf]
  %s316 = scalar_lea.vmem %s0, 129
  %v317 = vld [vmem:[%s316] ss:$8 sm:$0xf0]
  %vm318 = vcmask 1047556
  %v319 = vsel %vm318, %v317, %v315
  %320 = vrot.lane.b32.xlu0 %v319, 2
  %v321 = vpop.permute.xlu0 %320
  %vm322 = vcmask 31760
  %s323 = scalar_lea.vmem %s1, 16
  %324 = vst.msk [vmem:[%s323] sm:$0xff] %vm322, %v321
  %s325 = scalar_lea.vmem %s0, 193
  %v326 = vld [vmem:[%s325] ss:$8 sm:$0xf]
  %s327 = scalar_lea.vmem %s0, 193
  %v328 = vld [vmem:[%s327] ss:$8 sm:$0xf0]
  %vm329 = vcmask 1047556
  %v330 = vsel %vm329, %v328, %v326
  %331 = vrot.lane.b32.xlu0 %v330, 2
  %v332 = vpop.permute.xlu0 %331
  %vm333 = vcmask 31760
  %s334 = scalar_lea.vmem %s1, 24
  %335 = vst.msk [vmem:[%s334] sm:$0xff] %vm333, %v332

</llo_original>
